<compile_context>
chip_gen: v7x
topology: tpu7x:2x2x1
jax: 0.10.0
libtpu: 0.0.40
codegen_flags: <defaults>
</compile_context>

<pallas_src>
import functools

import jax
import jax.numpy as jnp
from jax.experimental import pallas as pl
from jax.experimental.pallas import tpu as pltpu

_TARGET_BLOCK_BYTES = 2 * 1024 * 1024   # ~0.5-2 MiB blocks reach >=85% HBM roofline


def _round_up(a, m):
    return -(-a // m) * m


def _sublane_tile(dtype):
    # physical second-minor tile: (8,128) f32 / (16,128) bf16 / (32,128) int8
    return 8 * max(1, 4 // jnp.dtype(dtype).itemsize)


def _pad_value(dtype):
    if jnp.issubdtype(dtype, jnp.floating):
        return -jnp.inf          # exactly what nn.MaxPool2d pads with
    return jnp.iinfo(dtype).min


def _vmem_limit_bytes():
    try:
        cap = int(pltpu.get_tpu_info().vmem_capacity_bytes)  # 64 MiB v7x, 128 MiB v5e/v6e
    except Exception:
        cap = 64 * 1024 * 1024
    return min(cap // 2, 64 * 1024 * 1024)


# ----------------------------------------------------------------------------
# channels-last kernel: block = (H, W, bc)  [lanes = N*C, sublanes = W]
# ----------------------------------------------------------------------------
def _fill_padded_cl(xp_ref, x_ref, pb, pa, pad_mode):
    h, w, bc = x_ref.shape
    hp, wp, _ = xp_ref.shape
    x = x_ref[...]
    dtype = x.dtype
    xp_ref[pb:pb + h, pb:pb + w, :] = x
    if pad_mode == "edge":
        # replicate right/bottom only (darknet size==2, stride==1 special case; pb==0)
        if pa:
            xp_ref[h:h + pa, 0:w, :] = jnp.broadcast_to(x[h - 1:h, :, :], (pa, w, bc))
            col = xp_ref[0:hp, w - 1:w, :]
            xp_ref[0:hp, w:w + pa, :] = jnp.broadcast_to(col, (hp, pa, bc))
    else:
        neg = _pad_value(dtype)
        # thin border slabs only -- no full-tile concatenates
        if pb:
            xp_ref[0:pb, :, :] = jnp.full((pb, wp, bc), neg, dtype)
            xp_ref[:, 0:pb, :] = jnp.full((hp, pb, bc), neg, dtype)
        if pa:
            xp_ref[pb + h:hp, :, :] = jnp.full((pa, wp, bc), neg, dtype)
            xp_ref[:, pb + w:wp, :] = jnp.full((hp, pa, bc), neg, dtype)


def _pool_cl_kernel(x_ref, o_ref, *scratch, size, stride, pad_before, pad_after,
                    pad_mode):
    h, w, bc = x_ref.shape
    out_h, out_w = o_ref.shape[0], o_ref.shape[1]
    k, s = size, stride
    pb, pa = pad_before, pad_after
    hp, wp = h + pb + pa, w + pb + pa

    if scratch:
        xp_ref, = scratch
        _fill_padded_cl(xp_ref, x_ref, pb, pa, pad_mode)
        src = xp_ref
    else:
        src = x_ref   # no padding needed; read the input block directly

    if s == 1:
        # Separable sliding-window max via prefix doubling, in place on the
        # padded scratch.  Shifted operands are ref loads at an offset: W shifts
        # are sublane offsets, H shifts plain address offsets -> no lane rotates.
        for axis, extent in ((1, wp), (0, hp)):
            cov = 1
            while cov < k:
                d = min(cov, k - cov)
                length = extent - d
                if axis == 1:
                    lo = src[:, 0:length, :]
                    hi = src[:, d:d + length, :]
                    src[:, 0:length, :] = jnp.maximum(lo, hi)
                else:
                    lo = src[0:length, :, :]
                    hi = src[d:d + length, :, :]
                    src[0:length, :, :] = jnp.maximum(lo, hi)
                cov += d
        o_ref[...] = src[0:out_h, 0:out_w, :].astype(o_ref.dtype)
    else:
        # stride > 1 (darknet: size == 2): accumulate the k*k taps directly at
        # output resolution -- no full-resolution intermediate or strided re-read.
        acc = None
        for di in range(k):
            for dj in range(k):
                tap = src[pl.ds(di, out_h, s), pl.ds(dj, out_w, s), :]
                acc = tap if acc is None else jnp.maximum(acc, tap)
        o_ref[...] = acc.astype(o_ref.dtype)


# ----------------------------------------------------------------------------
# plane kernel: block = (bc, H, W)  [lanes = W] -- used when W is already lane-dense
# ----------------------------------------------------------------------------
def _fill_padded_chw(xp_ref, x_ref, pb, pa, pad_mode):
    bc, h, w = x_ref.shape
    _, hp, wp = xp_ref.shape
    x = x_ref[...]
    dtype = x.dtype
    xp_ref[:, pb:pb + h, pb:pb + w] = x
    if pad_mode == "edge":
        if pa:
            xp_ref[:, h:h + pa, 0:w] = jnp.broadcast_to(x[:, h - 1:h, :], (bc, pa, w))
            col = xp_ref[:, 0:hp, w - 1:w]
            xp_ref[:, 0:hp, w:w + pa] = jnp.broadcast_to(col, (bc, hp, pa))
    else:
        neg = _pad_value(dtype)
        if pb:
            xp_ref[:, 0:pb, :] = jnp.full((bc, pb, wp), neg, dtype)
            xp_ref[:, :, 0:pb] = jnp.full((bc, hp, pb), neg, dtype)
        if pa:
            xp_ref[:, pb + h:hp, :] = jnp.full((bc, pa, wp), neg, dtype)
            xp_ref[:, :, pb + w:wp] = jnp.full((bc, hp, pa), neg, dtype)


def _pool_chw_kernel(x_ref, o_ref, *scratch, size, stride, pad_before, pad_after,
                     pad_mode):
    bc, h, w = x_ref.shape
    out_h, out_w = o_ref.shape[1], o_ref.shape[2]
    k, s = size, stride

    if scratch:
        xp_ref, = scratch
        _fill_padded_chw(xp_ref, x_ref, pad_before, pad_after, pad_mode)
        src = xp_ref
    else:
        src = x_ref

    # This path is only selected for large-spatial layers where k is small
    # (the 2x2 / stride-2 downsamples), so k*k direct taps are cheap.
    acc = None
    for di in range(k):
        hsl = pl.ds(di, out_h, s) if s > 1 else slice(di, di + out_h)
        for dj in range(k):
            wsl = pl.ds(dj, out_w, s) if s > 1 else slice(dj, dj + out_w)
            tap = src[:, hsl, wsl]
            acc = tap if acc is None else jnp.maximum(acc, tap)
    o_ref[...] = acc.astype(o_ref.dtype)


# ----------------------------------------------------------------------------
# wrapper
# ----------------------------------------------------------------------------
def maxpool2d_pallas(x, *, size, stride, pad_before, pad_after, pad_mode):
    """x: (N, C, H, W), unpadded.  Padding is applied inside the kernel."""
    n, c, h, w = x.shape
    k, s = size, stride
    pb, pa = pad_before, pad_after
    hp, wp = h + pb + pa, w + pb + pa
    ho = (hp - k) // s + 1
    wo = (wp - k) // s + 1
    if pad_mode != "edge":
        # -inf/dtype-min padding matches nn.MaxPool2d only if every window sees
        # at least one real element (true for all darknet configs).
        assert pb < k and pa < k, "half_padding >= size is not supported"
    nc = n * c
    isz = jnp.dtype(x.dtype).itemsize
    sub = _sublane_tile(x.dtype)
    vmem_limit = _vmem_limit_bytes()

    needs_scratch_cl = (s == 1) or (pb + pa > 0)
    needs_scratch_chw = (pb + pa > 0)

    # --- pick internal layout from OUTPUT lane density (stores are the measured
    #     bottleneck) plus a VMEM feasibility check for the channels-last block ---
    if nc <= 128:
        cl_den, cl_min_lanes = nc / 128.0, nc
    elif nc % 128 == 0:
        cl_den, cl_min_lanes = 1.0, 128
    else:
        cl_den, cl_min_lanes = nc / float(_round_up(nc, 128)), nc
    chw_den = wo / float(_round_up(wo, 128))

    # physical bytes per 128 NC-lanes in channels-last layout (double-buffered
    # in/out blocks + padded scratch + output-sized value temporaries),
    # rounded to (sublane,128) tiles
    per_128lanes = (2 * h * _round_up(w, sub)
                    + 4 * ho * _round_up(wo, sub)
                    + (hp * _round_up(wp, sub) if needs_scratch_cl else 0)
                    ) * 128 * isz
    cl_min_block = per_128lanes * max(1, _round_up(cl_min_lanes, 128) // 128)
    use_cl = (cl_den > chw_den) and (cl_min_block <= (3 * vmem_limit) // 4)

    kern_kw = dict(size=k, stride=s, pad_before=pb, pad_after=pa, pad_mode=pad_mode)
    cparams = pltpu.CompilerParams(dimension_semantics=("parallel",),
                                   vmem_limit_bytes=vmem_limit)

    if use_cl:
        # channels-last: N*C on lanes.  (In an NHWC pipeline these transposes vanish.)
        xt = jnp.transpose(x.reshape(nc, h, w), (1, 2, 0))      # (H, W, N*C)
        if nc % 128 == 0 and nc > 128:
            n128 = nc // 128
            m = max(1, min(n128,
                           max(1, _TARGET_BLOCK_BYTES // per_128lanes),
                           max(1, n128 // 4)))     # >= 4 grid steps when possible
            while n128 % m:
                m -= 1
            bc = 128 * m
        else:
            bc = nc                                 # single lane-block (full dim)
        grid = (nc // bc,)
        scratch = [pltpu.VMEM((hp, wp, bc), x.dtype)] if needs_scratch_cl else []
        out = pl.pallas_call(
            functools.partial(_pool_cl_kernel, **kern_kw),
            out_shape=jax.ShapeDtypeStruct((ho, wo, nc), x.dtype),
            grid_spec=pltpu.PrefetchScalarGridSpec(
                num_scalar_prefetch=0,
                grid=grid,
                in_specs=[pl.BlockSpec((h, w, bc), lambda i: (0, 0, i))],
                out_specs=pl.BlockSpec((ho, wo, bc), lambda i: (0, 0, i)),
                scratch_shapes=scratch),
            compiler_params=cparams,
        )(xt)
        return jnp.transpose(out, (2, 0, 1)).reshape(n, c, ho, wo)

    # plane layout: W on lanes (already dense for large-spatial layers)
    xf = x.reshape(nc, h, w)
    per_plane = (2 * _round_up(h, sub) * _round_up(w, 128)
                 + 4 * _round_up(ho, sub) * _round_up(wo, 128)
                 + (_round_up(hp, sub) * _round_up(wp, 128) if needs_scratch_chw else 0)
                 ) * isz
    bc = max(1, min(nc,
                    max(1, _TARGET_BLOCK_BYTES // per_plane),
                    max(1, nc // 4)))               # >= 4 grid steps when possible
    grid = (pl.cdiv(nc, bc),)   # partial last block OK: garbage reads, masked writes
    scratch = [pltpu.VMEM((bc, hp, wp), x.dtype)] if needs_scratch_chw else []
    out = pl.pallas_call(
        functools.partial(_pool_chw_kernel, **kern_kw),
        out_shape=jax.ShapeDtypeStruct((nc, ho, wo), x.dtype),
        grid_spec=pltpu.PrefetchScalarGridSpec(
            num_scalar_prefetch=0,
            grid=grid,
            in_specs=[pl.BlockSpec((bc, h, w), lambda i: (i, 0, 0))],
            out_specs=pl.BlockSpec((bc, ho, wo), lambda i: (i, 0, 0)),
            scratch_shapes=scratch),
        compiler_params=cparams,
    )(xf)
    return out.reshape(n, c, ho, wo)


class MaxpoolLayer:
    """JAX/Pallas equivalent of the darknet MaxpoolLayer (no learnable params)."""

    def __init__(self, size=2, stride=2, padding=1):
        self.has_learnable_params = False
        self.requires_layer_outputs = False
        self.is_output_layer = False
        self.size = size
        self.stride = stride
        self.padding = padding
        self.half_padding = padding // 2
        # Faithful to the PyTorch module: for size==2, stride==1, darknet
        # replicate-pads right/bottom by `padding` and runs
        # nn.MaxPool2d(size, stride=padding)   (stride == padding is intentional).
        self.special_pad = (self.size == 2 and self.stride == 1)

    def __call__(self, x):
        if self.special_pad:
            return maxpool2d_pallas(
                x, size=self.size, stride=self.padding,
                pad_before=0, pad_after=self.padding, pad_mode="edge")
        return maxpool2d_pallas(
            x, size=self.size, stride=self.stride,
            pad_before=self.half_padding, pad_after=self.half_padding,
            pad_mode="min")

    def to_string(self):
        return "MXPL: size: %d  stride: %d  pad: %d" % (
            self.size, self.stride, self.half_padding)


def _ref_pool(x, size, stride, spatial_pad):
    """Pure-JAX reference (correctness check only)."""
    init = -jnp.inf if jnp.issubdtype(x.dtype, jnp.floating) else jnp.iinfo(x.dtype).min
    return jax.lax.reduce_window(
        x, init, jax.lax.max,
        (1, 1, size, size), (1, 1, stride, stride),
        [(0, 0), (0, 0), spatial_pad, spatial_pad])


if __name__ == "__main__":
    key = jax.random.PRNGKey(0)
    # Deep / small-spatial tensor (SPP-like) -> exercises the channels-last path.
    x_spp = jax.random.normal(key, (2, 64, 13, 13), dtype=jnp.float32)
    # Shallow / large-spatial tensor -> exercises the plane (NCHW) path.
    x_big = jax.random.normal(jax.random.PRNGKey(1), (1, 4, 128, 128), dtype=jnp.float32)

    # A) SPP window: size=5, stride=1, padding=4 (-inf halo + prefix doubling)
    y_a = MaxpoolLayer(size=5, stride=1, padding=4)(x_spp)
    r_a = _ref_pool(x_spp, 5, 1, (2, 2))

    # B) yolov3-tiny special pad: size=2, stride=1, padding=1 (edge halo)
    y_b = MaxpoolLayer(size=2, stride=1, padding=1)(x_spp)
    x_edge = jnp.pad(x_spp, ((0, 0), (0, 0), (0, 1), (0, 1)), mode="edge")
    r_b = _ref_pool(x_edge, 2, 1, (0, 0))

    # C) standard downsample on the deep tensor: size=2, stride=2, padding=1
    y_c = MaxpoolLayer(size=2, stride=2, padding=1)(x_spp)
    r_c = _ref_pool(x_spp, 2, 2, (0, 0))

    # D) strided pooling with halo on the deep tensor: size=3, stride=2, padding=2
    y_d = MaxpoolLayer(size=3, stride=2, padding=2)(x_spp)
    r_d = _ref_pool(x_spp, 3, 2, (1, 1))

    # E) standard downsample, large spatial: size=2, stride=2, padding=1
    y_e = MaxpoolLayer(size=2, stride=2, padding=1)(x_big)
    r_e = _ref_pool(x_big, 2, 2, (0, 0))

    # F) strided pooling with halo, large spatial: size=3, stride=2, padding=2
    y_f = MaxpoolLayer(size=3, stride=2, padding=2)(x_big)
    r_f = _ref_pool(x_big, 3, 2, (1, 1))

    for v in (y_a, y_b, y_c, y_d, y_e, y_f):
        jax.block_until_ready(v)

    assert y_a.shape == (2, 64, 13, 13), y_a.shape
    assert y_b.shape == (2, 64, 13, 13), y_b.shape
    assert y_c.shape == (2, 64, 6, 6), y_c.shape
    assert y_d.shape == (2, 64, 7, 7), y_d.shape
    assert y_e.shape == (1, 4, 64, 64), y_e.shape
    assert y_f.shape == (1, 4, 64, 64), y_f.shape
    assert jnp.allclose(y_a, r_a), "SPP size=5 maxpool mismatch"
    assert jnp.allclose(y_b, r_b), "special-pad maxpool mismatch"
    assert jnp.allclose(y_c, r_c), "deep 2x2/2 maxpool mismatch"
    assert jnp.allclose(y_d, r_d), "deep 3x3/2 padded maxpool mismatch"
    assert jnp.allclose(y_e, r_e), "large-spatial 2x2/2 maxpool mismatch"
    assert jnp.allclose(y_f, r_f), "large-spatial 3x3/2 padded maxpool mismatch"

    print("KERNEL_OK")
</pallas_src>

<mosaic_0001>
module attributes {stable_mosaic.version = 11 : i64} {
  func.func @_pool_cl_kernel(%arg0: i32, %arg1: memref<13x13x128xf32, #tpu.memory_space<vmem>>, %arg2: memref<13x13x128xf32, #tpu.memory_space<vmem>>, %arg3: memref<17x17x128xf32, #tpu.memory_space<vmem>>) attributes {dimension_semantics = [#tpu.dimension_semantics<parallel>], iteration_bounds = array<i64: 1>, scalar_prefetch = 0 : i64, scratch_operands = 1 : i64, tpu.core_type = #tpu.core_type<tc>, window_params = [{transform_indices = @transform_0, window_bounds = array<i64: 13, 13, 128>}, {transform_indices = @transform_1, window_bounds = array<i64: 13, 13, 128>}]} {
    %c0 = arith.constant 0 : index
    %c0_0 = arith.constant 0 : index
    %c0_1 = arith.constant 0 : index
    %0 = vector.load %arg1[%c0, %c0_0, %c0_1] : memref<13x13x128xf32, #tpu.memory_space<vmem>>, vector<13x13x128xf32>
    %c2 = arith.constant 2 : index
    %c2_2 = arith.constant 2 : index
    %c0_3 = arith.constant 0 : index
    %1 = vector.load %arg3[%c2, %c2_2, %c0_3] : memref<17x17x128xf32, #tpu.memory_space<vmem>>, vector<13x13x128xf32>
    tpu.vector_store %arg3[%c2, %c2_2, %c0_3], %0 {strides = array<i32>} : memref<17x17x128xf32, #tpu.memory_space<vmem>>, vector<13x13x128xf32>,
    %cst = arith.constant 0xFF800000 : f32
    %2 = vector.broadcast %cst : f32 to vector<2x17x128xf32>
    %c0_4 = arith.constant 0 : index
    %c0_5 = arith.constant 0 : index
    %c0_6 = arith.constant 0 : index
    %3 = vector.load %arg3[%c0_4, %c0_5, %c0_6] : memref<17x17x128xf32, #tpu.memory_space<vmem>>, vector<2x17x128xf32>
    tpu.vector_store %arg3[%c0_4, %c0_5, %c0_6], %2 {strides = array<i32>} : memref<17x17x128xf32, #tpu.memory_space<vmem>>, vector<2x17x128xf32>,
    %cst_7 = arith.constant 0xFF800000 : f32
    %4 = vector.broadcast %cst_7 : f32 to vector<17x2x128xf32>
    %c0_8 = arith.constant 0 : index
    %c0_9 = arith.constant 0 : index
    %c0_10 = arith.constant 0 : index
    %5 = vector.load %arg3[%c0_8, %c0_9, %c0_10] : memref<17x17x128xf32, #tpu.memory_space<vmem>>, vector<17x2x128xf32>
    tpu.vector_store %arg3[%c0_8, %c0_9, %c0_10], %4 {strides = array<i32>} : memref<17x17x128xf32, #tpu.memory_space<vmem>>, vector<17x2x128xf32>,
    %cst_11 = arith.constant 0xFF800000 : f32
    %6 = vector.broadcast %cst_11 : f32 to vector<2x17x128xf32>
    %c15 = arith.constant 15 : index
    %c0_12 = arith.constant 0 : index
    %c0_13 = arith.constant 0 : index
    %7 = vector.load %arg3[%c15, %c0_12, %c0_13] : memref<17x17x128xf32, #tpu.memory_space<vmem>>, vector<2x17x128xf32>
    tpu.vector_store %arg3[%c15, %c0_12, %c0_13], %6 {strides = array<i32>} : memref<17x17x128xf32, #tpu.memory_space<vmem>>, vector<2x17x128xf32>,
    %cst_14 = arith.constant 0xFF800000 : f32
    %8 = vector.broadcast %cst_14 : f32 to vector<17x2x128xf32>
    %c0_15 = arith.constant 0 : index
    %c15_16 = arith.constant 15 : index
    %c0_17 = arith.constant 0 : index
    %9 = vector.load %arg3[%c0_15, %c15_16, %c0_17] : memref<17x17x128xf32, #tpu.memory_space<vmem>>, vector<17x2x128xf32>
    tpu.vector_store %arg3[%c0_15, %c15_16, %c0_17], %8 {strides = array<i32>} : memref<17x17x128xf32, #tpu.memory_space<vmem>>, vector<17x2x128xf32>,
    %c0_18 = arith.constant 0 : index
    %c0_19 = arith.constant 0 : index
    %c0_20 = arith.constant 0 : index
    %10 = vector.load %arg3[%c0_18, %c0_19, %c0_20] : memref<17x17x128xf32, #tpu.memory_space<vmem>>, vector<17x16x128xf32>
    %c0_21 = arith.constant 0 : index
    %c1 = arith.constant 1 : index
    %c0_22 = arith.constant 0 : index
    %11 = vector.load %arg3[%c0_21, %c1, %c0_22] : memref<17x17x128xf32, #tpu.memory_space<vmem>>, vector<17x16x128xf32>
    %12 = arith.maximumf %10, %11 : vector<17x16x128xf32>
    %c0_23 = arith.constant 0 : index
    %c0_24 = arith.constant 0 : index
    %c0_25 = arith.constant 0 : index
    %13 = vector.load %arg3[%c0_23, %c0_24, %c0_25] : memref<17x17x128xf32, #tpu.memory_space<vmem>>, vector<17x16x128xf32>
    tpu.vector_store %arg3[%c0_23, %c0_24, %c0_25], %12 {strides = array<i32>} : memref<17x17x128xf32, #tpu.memory_space<vmem>>, vector<17x16x128xf32>,
    %c0_26 = arith.constant 0 : index
    %c0_27 = arith.constant 0 : index
    %c0_28 = arith.constant 0 : index
    %14 = vector.load %arg3[%c0_26, %c0_27, %c0_28] : memref<17x17x128xf32, #tpu.memory_space<vmem>>, vector<17x15x128xf32>
    %c0_29 = arith.constant 0 : index
    %c2_30 = arith.constant 2 : index
    %c0_31 = arith.constant 0 : index
    %15 = vector.load %arg3[%c0_29, %c2_30, %c0_31] : memref<17x17x128xf32, #tpu.memory_space<vmem>>, vector<17x15x128xf32>
    %16 = arith.maximumf %14, %15 : vector<17x15x128xf32>
    %c0_32 = arith.constant 0 : index
    %c0_33 = arith.constant 0 : index
    %c0_34 = arith.constant 0 : index
    %17 = vector.load %arg3[%c0_32, %c0_33, %c0_34] : memref<17x17x128xf32, #tpu.memory_space<vmem>>, vector<17x15x128xf32>
    tpu.vector_store %arg3[%c0_32, %c0_33, %c0_34], %16 {strides = array<i32>} : memref<17x17x128xf32, #tpu.memory_space<vmem>>, vector<17x15x128xf32>,
    %c0_35 = arith.constant 0 : index
    %c0_36 = arith.constant 0 : index
    %c0_37 = arith.constant 0 : index
    %18 = vector.load %arg3[%c0_35, %c0_36, %c0_37] : memref<17x17x128xf32, #tpu.memory_space<vmem>>, vector<17x16x128xf32>
    %c0_38 = arith.constant 0 : index
    %c1_39 = arith.constant 1 : index
    %c0_40 = arith.constant 0 : index
    %19 = vector.load %arg3[%c0_38, %c1_39, %c0_40] : memref<17x17x128xf32, #tpu.memory_space<vmem>>, vector<17x16x128xf32>
    %20 = arith.maximumf %18, %19 : vector<17x16x128xf32>
    %c0_41 = arith.constant 0 : index
    %c0_42 = arith.constant 0 : index
    %c0_43 = arith.constant 0 : index
    %21 = vector.load %arg3[%c0_41, %c0_42, %c0_43] : memref<17x17x128xf32, #tpu.memory_space<vmem>>, vector<17x16x128xf32>
    tpu.vector_store %arg3[%c0_41, %c0_42, %c0_43], %20 {strides = array<i32>} : memref<17x17x128xf32, #tpu.memory_space<vmem>>, vector<17x16x128xf32>,
    %c0_44 = arith.constant 0 : index
    %c0_45 = arith.constant 0 : index
    %c0_46 = arith.constant 0 : index
    %22 = vector.load %arg3[%c0_44, %c0_45, %c0_46] : memref<17x17x128xf32, #tpu.memory_space<vmem>>, vector<16x17x128xf32>
    %c1_47 = arith.constant 1 : index
    %c0_48 = arith.constant 0 : index
    %c0_49 = arith.constant 0 : index
    %23 = vector.load %arg3[%c1_47, %c0_48, %c0_49] : memref<17x17x128xf32, #tpu.memory_space<vmem>>, vector<16x17x128xf32>
    %24 = arith.maximumf %22, %23 : vector<16x17x128xf32>
    %c0_50 = arith.constant 0 : index
    %c0_51 = arith.constant 0 : index
    %c0_52 = arith.constant 0 : index
    %25 = vector.load %arg3[%c0_50, %c0_51, %c0_52] : memref<17x17x128xf32, #tpu.memory_space<vmem>>, vector<16x17x128xf32>
    tpu.vector_store %arg3[%c0_50, %c0_51, %c0_52], %24 {strides = array<i32>} : memref<17x17x128xf32, #tpu.memory_space<vmem>>, vector<16x17x128xf32>,
    %c0_53 = arith.constant 0 : index
    %c0_54 = arith.constant 0 : index
    %c0_55 = arith.constant 0 : index
    %26 = vector.load %arg3[%c0_53, %c0_54, %c0_55] : memref<17x17x128xf32, #tpu.memory_space<vmem>>, vector<15x17x128xf32>
    %c2_56 = arith.constant 2 : index
    %c0_57 = arith.constant 0 : index
    %c0_58 = arith.constant 0 : index
    %27 = vector.load %arg3[%c2_56, %c0_57, %c0_58] : memref<17x17x128xf32, #tpu.memory_space<vmem>>, vector<15x17x128xf32>
    %28 = arith.maximumf %26, %27 : vector<15x17x128xf32>
    %c0_59 = arith.constant 0 : index
    %c0_60 = arith.constant 0 : index
    %c0_61 = arith.constant 0 : index
    %29 = vector.load %arg3[%c0_59, %c0_60, %c0_61] : memref<17x17x128xf32, #tpu.memory_space<vmem>>, vector<15x17x128xf32>
    tpu.vector_store %arg3[%c0_59, %c0_60, %c0_61], %28 {strides = array<i32>} : memref<17x17x128xf32, #tpu.memory_space<vmem>>, vector<15x17x128xf32>,
    %c0_62 = arith.constant 0 : index
    %c0_63 = arith.constant 0 : index
    %c0_64 = arith.constant 0 : index
    %30 = vector.load %arg3[%c0_62, %c0_63, %c0_64] : memref<17x17x128xf32, #tpu.memory_space<vmem>>, vector<16x17x128xf32>
    %c1_65 = arith.constant 1 : index
    %c0_66 = arith.constant 0 : index
    %c0_67 = arith.constant 0 : index
    %31 = vector.load %arg3[%c1_65, %c0_66, %c0_67] : memref<17x17x128xf32, #tpu.memory_space<vmem>>, vector<16x17x128xf32>
    %32 = arith.maximumf %30, %31 : vector<16x17x128xf32>
    %c0_68 = arith.constant 0 : index
    %c0_69 = arith.constant 0 : index
    %c0_70 = arith.constant 0 : index
    %33 = vector.load %arg3[%c0_68, %c0_69, %c0_70] : memref<17x17x128xf32, #tpu.memory_space<vmem>>, vector<16x17x128xf32>
    tpu.vector_store %arg3[%c0_68, %c0_69, %c0_70], %32 {strides = array<i32>} : memref<17x17x128xf32, #tpu.memory_space<vmem>>, vector<16x17x128xf32>,
    %c0_71 = arith.constant 0 : index
    %c0_72 = arith.constant 0 : index
    %c0_73 = arith.constant 0 : index
    %34 = vector.load %arg3[%c0_71, %c0_72, %c0_73] : memref<17x17x128xf32, #tpu.memory_space<vmem>>, vector<13x13x128xf32>
    %c0_74 = arith.constant 0 : index
    %c0_75 = arith.constant 0 : index
    %c0_76 = arith.constant 0 : index
    %35 = vector.load %arg2[%c0_74, %c0_75, %c0_76] : memref<13x13x128xf32, #tpu.memory_space<vmem>>, vector<13x13x128xf32>
    tpu.vector_store %arg2[%c0_74, %c0_75, %c0_76], %34 {strides = array<i32>} : memref<13x13x128xf32, #tpu.memory_space<vmem>>, vector<13x13x128xf32>,
    return
  }
  func.func @transform_0(%arg0: i32) -> (i32, i32, i32) {
    %c0_i32 = arith.constant 0 : i32
    %c0_i32_0 = arith.constant 0 : i32
    %c0_i32_1 = arith.constant 0 : i32
    return %c0_i32, %c0_i32_0, %arg0 : i32, i32, i32
  }
  func.func @transform_1(%arg0: i32) -> (i32, i32, i32) {
    %c0_i32 = arith.constant 0 : i32
    %c0_i32_0 = arith.constant 0 : i32
    %c0_i32_1 = arith.constant 0 : i32
    return %c0_i32, %c0_i32_0, %arg0 : i32, i32, i32
  }
}

</mosaic_0001>

<llo_original>
// kernel: tpu_custom_call.1
$region0: #{tpu_custom_call.1}
  #allocation0 [shape = 'u32[]', space=smem, size = 0x4, offset = 0x4, fixed_abs, tag = 'smem constant byte address 0x4 - core index']
  #allocation1 [shape = 'u32[144,128]{1,0:T(1,128)}', space=vmem, size = 0x12000, scoped, tag = 'internal scratch']
  #allocation2 [shape = 'f32[17,17,128]{2,1,0:T(8,128)}', space=vmem, size = 0x33000, scoped, tag = 'scratch operand']
  %s0 = inlined_call_operand.hbm [shape: f32[13,13,128], index: 0, kind: input, shape index: {}]
  %s1 = inlined_call_operand.hbm [shape: f32[13,13,128], index: 1, kind: output, shape index: {}]
  %s2 = sld [smem:[#allocation0]]
  $region18: #{tpu_custom_call.1} parent=0
    _
  %s4 = ssub.s32 1, %s2
  %s5 = scalar_select 0, %s4, %s2
  $region1: #{tpu_custom_call.1} parent=0
    #allocation3 [shape = 'u8[106496]{0}', space=vmem, size = 0x1a000, scoped, tag = 'input window, operand 0, single buffered']
    #allocation4 [shape = 's32[1]{0}', space=sflag, size = 0x4, scoped, tag = 'scoped memory for tpu_custom_call.1']
    #allocation5 [shape = 's32[1]{0}', space=sflag, size = 0x4, scoped, tag = 'scoped memory for tpu_custom_call.1']
    #allocation6 [shape = 'u8[106496]{0}', space=vmem, size = 0x1a000, scoped, tag = 'output window, operand 0, single buffered']
    %6 = vsyncpa [#allocation4], 0
    %7 = vsyncpa [#allocation5], 0
    // Predicated region
    $region2: #{tpu_custom_call.1} parent=1 // pred_check
      _
    $region3: #{tpu_custom_call.1} parent=1 // pred_check_branch
      %9 = sbr.rel (0) target = $region5
    $region4: #{tpu_custom_call.1} parent=1 // pred_region
      %s11 = ssub.s32 3328, 3328
      %12 = vsyncadd [#allocation4], %s11
      %s13 = sshll.u32 [#allocation3], 4
      %s14 = int_to_ptr.vmem [resolvable:$true] %s13
      %19 = dma.hbm_to_vmem [thread:$0]  %s0, 3328, %s14, [#allocation4], 128, 128, 8
    $region5: #{tpu_custom_call.1} parent=1 // pred_fallthru
      _
    // Predicated region
    $region6: #{tpu_custom_call.1} parent=1 // pred_check
      _
    $region7: #{tpu_custom_call.1} parent=1 // pred_check_branch
      %21 = sbr.rel (0) target = $region9
    $region8: #{tpu_custom_call.1} parent=1 // pred_region
      %22 = dma.done [#allocation4], 3328
    $region9: #{tpu_custom_call.1} parent=1 // pred_fallthru
      _
    %v23 = vld [vmem:[#allocation3] sm:$0xff]
    %v24 = vld [vmem:[#allocation3 + $0x8] sm:$0x1f]
    %v25 = vld [vmem:[#allocation3 + $0x10] sm:$0xff]
    %v26 = vld [vmem:[#allocation3 + $0x18] sm:$0x1f]
    %v27 = vld [vmem:[#allocation3 + $0x20] sm:$0xff]
    %v28 = vld [vmem:[#allocation3 + $0x28] sm:$0x1f]
    %v29 = vld [vmem:[#allocation3 + $0x30] sm:$0xff]
    %v30 = vld [vmem:[#allocation3 + $0x38] sm:$0x1f]
    %v31 = vld [vmem:[#allocation3 + $0x40] sm:$0xff]
    %v32 = vld [vmem:[#allocation3 + $0x48] sm:$0x1f]
    %v33 = vld [vmem:[#allocation3 + $0x50] sm:$0xff]
    %v34 = vld [vmem:[#allocation3 + $0x58] sm:$0x1f]
    %v35 = vld [vmem:[#allocation3 + $0x60] sm:$0xff]
    %v36 = vld [vmem:[#allocation3 + $0x68] sm:$0x1f]
    %v37 = vld [vmem:[#allocation3 + $0x70] sm:$0xff]
    %v38 = vld [vmem:[#allocation3 + $0x78] sm:$0x1f]
    %v39 = vld [vmem:[#allocation3 + $0x80] sm:$0xff]
    %v40 = vld [vmem:[#allocation3 + $0x88] sm:$0x1f]
    %v41 = vld [vmem:[#allocation3 + $0x90] sm:$0xff]
    %v42 = vld [vmem:[#allocation3 + $0x98] sm:$0x1f]
    %v43 = vld [vmem:[#allocation3 + $0xa0] sm:$0xff]
    %v44 = vld [vmem:[#allocation3 + $0xa8] sm:$0x1f]
    %v45 = vld [vmem:[#allocation3 + $0xb0] sm:$0xff]
    %v46 = vld [vmem:[#allocation3 + $0xb8] sm:$0x1f]
    %v47 = vld [vmem:[#allocation3 + $0xc0] sm:$0xff]
    %v48 = vld [vmem:[#allocation3 + $0xc8] sm:$0x1f]
    %s49 = scalar_lea.vmem [#allocation2], 48
    %50 = vst [vmem:[%s49 + $0x2] sm:$0xff] %v23
    %51 = vst [vmem:[%s49 + $0xa] sm:$0x1f] %v24
    %52 = vst [vmem:[%s49 + $0x1a] sm:$0xff] %v25
    %53 = vst [vmem:[%s49 + $0x22] sm:$0x1f] %v26
    %54 = vst [vmem:[%s49 + $0x32] sm:$0xff] %v27
    %55 = vst [vmem:[%s49 + $0x3a] sm:$0x1f] %v28
    %56 = vst [vmem:[%s49 + $0x4a] sm:$0xff] %v29
    %57 = vst [vmem:[%s49 + $0x52] sm:$0x1f] %v30
    %58 = vst [vmem:[%s49 + $0x62] sm:$0xff] %v31
    %59 = vst [vmem:[%s49 + $0x6a] sm:$0x1f] %v32
    %60 = vst [vmem:[%s49 + $0x7a] sm:$0xff] %v33
    %61 = vst [vmem:[%s49 + $0x82] sm:$0x1f] %v34
    %62 = vst [vmem:[%s49 + $0x92] sm:$0xff] %v35
    %63 = vst [vmem:[%s49 + $0x9a] sm:$0x1f] %v36
    %64 = vst [vmem:[%s49 + $0xaa] sm:$0xff] %v37
    %65 = vst [vmem:[%s49 + $0xb2] sm:$0x1f] %v38
    %66 = vst [vmem:[%s49 + $0xc2] sm:$0xff] %v39
    %67 = vst [vmem:[%s49 + $0xca] sm:$0x1f] %v40
    %68 = vst [vmem:[%s49 + $0xda] sm:$0xff] %v41
    %69 = vst [vmem:[%s49 + $0xe2] sm:$0x1f] %v42
    %70 = vst [vmem:[%s49 + $0xf2] sm:$0xff] %v43
    %71 = vst [vmem:[%s49 + $0xfa] sm:$0x1f] %v44
    %72 = vst [vmem:[%s49 + $0x10a] sm:$0xff] %v45
    %73 = vst [vmem:[%s49 + $0x112] sm:$0x1f] %v46
    %74 = vst [vmem:[%s49 + $0x122] sm:$0xff] %v47
    %75 = vst [vmem:[%s49 + $0x12a] sm:$0x1f] %v48
    %76 = vst [vmem:[#allocation2] sm:$0xff] -inf
    %77 = vst [vmem:[#allocation2 + $0x8] sm:$0xff] -inf
    %78 = vst [vmem:[#allocation2 + $0x10] sm:$0x1] -inf
    %79 = vst [vmem:[#allocation2 + $0x18] sm:$0xff] -inf
    %80 = vst [vmem:[#allocation2 + $0x20] sm:$0xff] -inf
    %81 = vst [vmem:[#allocation2 + $0x28] sm:$0x1] -inf
    %82 = vst [vmem:[#allocation2] sm:$0x3] -inf
    %83 = vst [vmem:[#allocation2 + $0x18] sm:$0x3] -inf
    %84 = vst [vmem:[#allocation2 + $0x30] sm:$0x3] -inf
    %85 = vst [vmem:[#allocation2 + $0x48] sm:$0x3] -inf
    %86 = vst [vmem:[#allocation2 + $0x60] sm:$0x3] -inf
    %87 = vst [vmem:[#allocation2 + $0x78] sm:$0x3] -inf
    %88 = vst [vmem:[#allocation2 + $0x90] sm:$0x3] -inf
    %89 = vst [vmem:[#allocation2 + $0xa8] sm:$0x3] -inf
    %90 = vst [vmem:[#allocation2 + $0xc0] sm:$0x3] -inf
    %91 = vst [vmem:[#allocation2 + $0xd8] sm:$0x3] -inf
    %92 = vst [vmem:[#allocation2 + $0xf0] sm:$0x3] -inf
    %93 = vst [vmem:[#allocation2 + $0x108] sm:$0x3] -inf
    %94 = vst [vmem:[#allocation2 + $0x120] sm:$0x3] -inf
    %95 = vst [vmem:[#allocation2 + $0x138] sm:$0x3] -inf
    %96 = vst [vmem:[#allocation2 + $0x150] sm:$0x3] -inf
    %97 = vst [vmem:[#allocation2 + $0x168] sm:$0x3] -inf
    %98 = vst [vmem:[#allocation2 + $0x180] sm:$0x3] -inf
    %s99 = scalar_lea.vmem [#allocation2], 360
    %100 = vst [vmem:[%s99] sm:$0xff] -inf
    %101 = vst [vmem:[%s99 + $0x8] sm:$0xff] -inf
    %102 = vst [vmem:[%s99 + $0x10] sm:$0x1] -inf
    %103 = vst [vmem:[%s99 + $0x18] sm:$0xff] -inf
    %104 = vst [vmem:[%s99 + $0x20] sm:$0xff] -inf
    %105 = vst [vmem:[%s99 + $0x28] sm:$0x1] -inf
    %106 = vst [vmem:[#allocation2 + $0xf] sm:$0x3] -inf
    %107 = vst [vmem:[#allocation2 + $0x27] sm:$0x3] -inf
    %108 = vst [vmem:[#allocation2 + $0x3f] sm:$0x3] -inf
    %109 = vst [vmem:[#allocation2 + $0x57] sm:$0x3] -inf
    %110 = vst [vmem:[#allocation2 + $0x6f] sm:$0x3] -inf
    %111 = vst [vmem:[#allocation2 + $0x87] sm:$0x3] -inf
    %112 = vst [vmem:[#allocation2 + $0x9f] sm:$0x3] -inf
    %113 = vst [vmem:[#allocation2 + $0xb7] sm:$0x3] -inf
    %114 = vst [vmem:[#allocation2 + $0xcf] sm:$0x3] -inf
    %115 = vst [vmem:[#allocation2 + $0xe7] sm:$0x3] -inf
    %116 = vst [vmem:[#allocation2 + $0xff] sm:$0x3] -inf
    %117 = vst [vmem:[#allocation2 + $0x117] sm:$0x3] -inf
    %118 = vst [vmem:[#allocation2 + $0x12f] sm:$0x3] -inf
    %119 = vst [vmem:[#allocation2 + $0x147] sm:$0x3] -inf
    %120 = vst [vmem:[#allocation2 + $0x15f] sm:$0x3] -inf
    %121 = vst [vmem:[#allocation2 + $0x177] sm:$0x3] -inf
    %122 = vst [vmem:[#allocation2 + $0x18f] sm:$0x3] -inf
    %v123 = vld [vmem:[#allocation2] sm:$0xff]
    %v124 = vld [vmem:[#allocation2 + $0x8] sm:$0xff]
    %v125 = vld [vmem:[#allocation2 + $0x18] sm:$0xff]
    %v126 = vld [vmem:[#allocation2 + $0x20] sm:$0xff]
    %v127 = vld [vmem:[#allocation2 + $0x30] sm:$0xff]
    %v128 = vld [vmem:[#allocation2 + $0x38] sm:$0xff]
    %v129 = vld [vmem:[#allocation2 + $0x48] sm:$0xff]
    %v130 = vld [vmem:[#allocation2 + $0x50] sm:$0xff]
    %v131 = vld [vmem:[#allocation2 + $0x60] sm:$0xff]
    %v132 = vld [vmem:[#allocation2 + $0x68] sm:$0xff]
    %v133 = vld [vmem:[#allocation2 + $0x78] sm:$0xff]
    %v134 = vld [vmem:[#allocation2 + $0x80] sm:$0xff]
    %v135 = vld [vmem:[#allocation2 + $0x90] sm:$0xff]
    %v136 = vld [vmem:[#allocation2 + $0x98] sm:$0xff]
    %v137 = vld [vmem:[#allocation2 + $0xa8] sm:$0xff]
    %v138 = vld [vmem:[#allocation2 + $0xb0] sm:$0xff]
    %v139 = vld [vmem:[#allocation2 + $0xc0] sm:$0xff]
    %v140 = vld [vmem:[#allocation2 + $0xc8] sm:$0xff]
    %v141 = vld [vmem:[#allocation2 + $0xd8] sm:$0xff]
    %v142 = vld [vmem:[#allocation2 + $0xe0] sm:$0xff]
    %v143 = vld [vmem:[#allocation2 + $0xf0] sm:$0xff]
    %v144 = vld [vmem:[#allocation2 + $0xf8] sm:$0xff]
    %v145 = vld [vmem:[#allocation2 + $0x108] sm:$0xff]
    %v146 = vld [vmem:[#allocation2 + $0x110] sm:$0xff]
    %v147 = vld [vmem:[#allocation2 + $0x120] sm:$0xff]
    %v148 = vld [vmem:[#allocation2 + $0x128] sm:$0xff]
    %v149 = vld [vmem:[#allocation2 + $0x138] sm:$0xff]
    %v150 = vld [vmem:[#allocation2 + $0x140] sm:$0xff]
    %v151 = vld [vmem:[#allocation2 + $0x150] sm:$0xff]
    %v152 = vld [vmem:[#allocation2 + $0x158] sm:$0xff]
    %v153 = vld [vmem:[#allocation2 + $0x168] sm:$0xff]
    %v154 = vld [vmem:[#allocation2 + $0x170] sm:$0xff]
    %v155 = vld [vmem:[#allocation2 + $0x180] sm:$0xff]
    %v156 = vld [vmem:[#allocation2 + $0x188] sm:$0xff]
    %v157 = vld [vmem:[#allocation2 + $0x1] sm:$0xff]
    %v158 = vld [vmem:[#allocation2 + $0x9] sm:$0xff]
    %v159 = vld [vmem:[#allocation2 + $0x19] sm:$0xff]
    %v160 = vld [vmem:[#allocation2 + $0x21] sm:$0xff]
    %v161 = vld [vmem:[#allocation2 + $0x31] sm:$0xff]
    %v162 = vld [vmem:[#allocation2 + $0x39] sm:$0xff]
    %v163 = vld [vmem:[#allocation2 + $0x49] sm:$0xff]
    %v164 = vld [vmem:[#allocation2 + $0x51] sm:$0xff]
    %v165 = vld [vmem:[#allocation2 + $0x61] sm:$0xff]
    %v166 = vld [vmem:[#allocation2 + $0x69] sm:$0xff]
    %v167 = vld [vmem:[#allocation2 + $0x79] sm:$0xff]
    %v168 = vld [vmem:[#allocation2 + $0x81] sm:$0xff]
    %v169 = vld [vmem:[#allocation2 + $0x91] sm:$0xff]
    %v170 = vld [vmem:[#allocation2 + $0x99] sm:$0xff]
    %v171 = vld [vmem:[#allocation2 + $0xa9] sm:$0xff]
    %v172 = vld [vmem:[#allocation2 + $0xb1] sm:$0xff]
    %v173 = vld [vmem:[#allocation2 + $0xc1] sm:$0xff]
    %v174 = vld [vmem:[#allocation2 + $0xc9] sm:$0xff]
    %v175 = vld [vmem:[#allocation2 + $0xd9] sm:$0xff]
    %v176 = vld [vmem:[#allocation2 + $0xe1] sm:$0xff]
    %v177 = vld [vmem:[#allocation2 + $0xf1] sm:$0xff]
    %v178 = vld [vmem:[#allocation2 + $0xf9] sm:$0xff]
    %v179 = vld [vmem:[#allocation2 + $0x109] sm:$0xff]
    %v180 = vld [vmem:[#allocation2 + $0x111] sm:$0xff]
    %v181 = vld [vmem:[#allocation2 + $0x121] sm:$0xff]
    %v182 = vld [vmem:[#allocation2 + $0x129] sm:$0xff]
    %v183 = vld [vmem:[#allocation2 + $0x139] sm:$0xff]
    %v184 = vld [vmem:[#allocation2 + $0x141] sm:$0xff]
    %v185 = vld [vmem:[#allocation2 + $0x151] sm:$0xff]
    %v186 = vld [vmem:[#allocation2 + $0x159] sm:$0xff]
    %v187 = vld [vmem:[#allocation2 + $0x169] sm:$0xff]
    %v188 = vld [vmem:[#allocation2 + $0x171] sm:$0xff]
    %v189 = vld [vmem:[#allocation2 + $0x181] sm:$0xff]
    %v190 = vld [vmem:[#allocation2 + $0x189] sm:$0xff]
    %v191 = vmax.f32 %v123, %v157
    %v192 = vmax.f32 %v124, %v158
    %v193 = vmax.f32 %v125, %v159
    %v194 = vmax.f32 %v126, %v160
    %v195 = vmax.f32 %v127, %v161
    %v196 = vmax.f32 %v128, %v162
    %v197 = vmax.f32 %v129, %v163
    %v198 = vmax.f32 %v130, %v164
    %v199 = vmax.f32 %v131, %v165
    %v200 = vmax.f32 %v132, %v166
    %v201 = vmax.f32 %v133, %v167
    %v202 = vmax.f32 %v134, %v168
    %v203 = vmax.f32 %v135, %v169
    %v204 = vmax.f32 %v136, %v170
    %v205 = vmax.f32 %v137, %v171
    %v206 = vmax.f32 %v138, %v172
    %v207 = vmax.f32 %v139, %v173
    %v208 = vmax.f32 %v140, %v174
    %v209 = vmax.f32 %v141, %v175
    %v210 = vmax.f32 %v142, %v176
    %v211 = vmax.f32 %v143, %v177
    %v212 = vmax.f32 %v144, %v178
    %v213 = vmax.f32 %v145, %v179
    %v214 = vmax.f32 %v146, %v180
    %v215 = vmax.f32 %v147, %v181
    %v216 = vmax.f32 %v148, %v182
    %v217 = vmax.f32 %v149, %v183
    %v218 = vmax.f32 %v150, %v184
    %v219 = vmax.f32 %v151, %v185
    %v220 = vmax.f32 %v152, %v186
    %v221 = vmax.f32 %v153, %v187
    %v222 = vmax.f32 %v154, %v188
    %v223 = vmax.f32 %v155, %v189
    %v224 = vmax.f32 %v156, %v190
    %225 = vst [vmem:[#allocation2] sm:$0xff] %v191
    %226 = vst [vmem:[#allocation2 + $0x8] sm:$0xff] %v192
    %227 = vst [vmem:[#allocation2 + $0x18] sm:$0xff] %v193
    %228 = vst [vmem:[#allocation2 + $0x20] sm:$0xff] %v194
    %229 = vst [vmem:[#allocation2 + $0x30] sm:$0xff] %v195
    %230 = vst [vmem:[#allocation2 + $0x38] sm:$0xff] %v196
    %231 = vst [vmem:[#allocation2 + $0x48] sm:$0xff] %v197
    %232 = vst [vmem:[#allocation2 + $0x50] sm:$0xff] %v198
    %233 = vst [vmem:[#allocation2 + $0x60] sm:$0xff] %v199
    %234 = vst [vmem:[#allocation2 + $0x68] sm:$0xff] %v200
    %235 = vst [vmem:[#allocation2 + $0x78] sm:$0xff] %v201
    %236 = vst [vmem:[#allocation2 + $0x80] sm:$0xff] %v202
    %237 = vst [vmem:[#allocation2 + $0x90] sm:$0xff] %v203
    %238 = vst [vmem:[#allocation2 + $0x98] sm:$0xff] %v204
    %239 = vst [vmem:[#allocation2 + $0xa8] sm:$0xff] %v205
    %240 = vst [vmem:[#allocation2 + $0xb0] sm:$0xff] %v206
    %241 = vst [vmem:[#allocation2 + $0xc0] sm:$0xff] %v207
    %242 = vst [vmem:[#allocation2 + $0xc8] sm:$0xff] %v208
    %243 = vst [vmem:[#allocation2 + $0xd8] sm:$0xff] %v209
    %244 = vst [vmem:[#allocation2 + $0xe0] sm:$0xff] %v210
    %245 = vst [vmem:[#allocation2 + $0xf0] sm:$0xff] %v211
    %246 = vst [vmem:[#allocation2 + $0xf8] sm:$0xff] %v212
    %247 = vst [vmem:[#allocation2 + $0x108] sm:$0xff] %v213
    %248 = vst [vmem:[#allocation2 + $0x110] sm:$0xff] %v214
    %249 = vst [vmem:[#allocation2 + $0x120] sm:$0xff] %v215
    %250 = vst [vmem:[#allocation2 + $0x128] sm:$0xff] %v216
    %251 = vst [vmem:[#allocation2 + $0x138] sm:$0xff] %v217
    %252 = vst [vmem:[#allocation2 + $0x140] sm:$0xff] %v218
    %253 = vst [vmem:[#allocation2 + $0x150] sm:$0xff] %v219
    %254 = vst [vmem:[#allocation2 + $0x158] sm:$0xff] %v220
    %255 = vst [vmem:[#allocation2 + $0x168] sm:$0xff] %v221
    %256 = vst [vmem:[#allocation2 + $0x170] sm:$0xff] %v222
    %257 = vst [vmem:[#allocation2 + $0x180] sm:$0xff] %v223
    %258 = vst [vmem:[#allocation2 + $0x188] sm:$0xff] %v224
    %v259 = vld [vmem:[#allocation2] sm:$0xff]
    %v260 = vld [vmem:[#allocation2 + $0x8] sm:$0x7f]
    %v261 = vld [vmem:[#allocation2 + $0x18] sm:$0xff]
    %v262 = vld [vmem:[#allocation2 + $0x20] sm:$0x7f]
    %v263 = vld [vmem:[#allocation2 + $0x30] sm:$0xff]
    %v264 = vld [vmem:[#allocation2 + $0x38] sm:$0x7f]
    %v265 = vld [vmem:[#allocation2 + $0x48] sm:$0xff]
    %v266 = vld [vmem:[#allocation2 + $0x50] sm:$0x7f]
    %v267 = vld [vmem:[#allocation2 + $0x60] sm:$0xff]
    %v268 = vld [vmem:[#allocation2 + $0x68] sm:$0x7f]
    %v269 = vld [vmem:[#allocation2 + $0x78] sm:$0xff]
    %v270 = vld [vmem:[#allocation2 + $0x80] sm:$0x7f]
    %v271 = vld [vmem:[#allocation2 + $0x90] sm:$0xff]
    %v272 = vld [vmem:[#allocation2 + $0x98] sm:$0x7f]
    %v273 = vld [vmem:[#allocation2 + $0xa8] sm:$0xff]
    %v274 = vld [vmem:[#allocation2 + $0xb0] sm:$0x7f]
    %v275 = vld [vmem:[#allocation2 + $0xc0] sm:$0xff]
    %v276 = vld [vmem:[#allocation2 + $0xc8] sm:$0x7f]
    %v277 = vld [vmem:[#allocation2 + $0xd8] sm:$0xff]
    %v278 = vld [vmem:[#allocation2 + $0xe0] sm:$0x7f]
    %v279 = vld [vmem:[#allocation2 + $0xf0] sm:$0xff]
    %v280 = vld [vmem:[#allocation2 + $0xf8] sm:$0x7f]
    %v281 = vld [vmem:[#allocation2 + $0x108] sm:$0xff]
    %v282 = vld [vmem:[#allocation2 + $0x110] sm:$0x7f]
    %v283 = vld [vmem:[#allocation2 + $0x120] sm:$0xff]
    %v284 = vld [vmem:[#allocation2 + $0x128] sm:$0x7f]
    %v285 = vld [vmem:[#allocation2 + $0x138] sm:$0xff]
    %v286 = vld [vmem:[#allocation2 + $0x140] sm:$0x7f]
    %v287 = vld [vmem:[#allocation2 + $0x150] sm:$0xff]
    %v288 = vld [vmem:[#allocation2 + $0x158] sm:$0x7f]
    %v289 = vld [vmem:[#allocation2 + $0x168] sm:$0xff]
    %v290 = vld [vmem:[#allocation2 + $0x170] sm:$0x7f]
    %v291 = vld [vmem:[#allocation2 + $0x180] sm:$0xff]
    %v292 = vld [vmem:[#allocation2 + $0x188] sm:$0x7f]
    %v293 = vld [vmem:[#allocation2 + $0x2] sm:$0xff]
    %v294 = vld [vmem:[#allocation2 + $0xa] sm:$0x7f]
    %v295 = vld [vmem:[#allocation2 + $0x1a] sm:$0xff]
    %v296 = vld [vmem:[#allocation2 + $0x22] sm:$0x7f]
    %v297 = vld [vmem:[#allocation2 + $0x32] sm:$0xff]
    %v298 = vld [vmem:[#allocation2 + $0x3a] sm:$0x7f]
    %v299 = vld [vmem:[#allocation2 + $0x4a] sm:$0xff]
    %v300 = vld [vmem:[#allocation2 + $0x52] sm:$0x7f]
    %v301 = vld [vmem:[#allocation2 + $0x62] sm:$0xff]
    %v302 = vld [vmem:[#allocation2 + $0x6a] sm:$0x7f]
    %v303 = vld [vmem:[#allocation2 + $0x7a] sm:$0xff]
    %v304 = vld [vmem:[#allocation2 + $0x82] sm:$0x7f]
    %v305 = vld [vmem:[#allocation2 + $0x92] sm:$0xff]
    %v306 = vld [vmem:[#allocation2 + $0x9a] sm:$0x7f]
    %v307 = vld [vmem:[#allocation2 + $0xaa] sm:$0xff]
    %v308 = vld [vmem:[#allocation2 + $0xb2] sm:$0x7f]
    %v309 = vld [vmem:[#allocation2 + $0xc2] sm:$0xff]
    %v310 = vld [vmem:[#allocation2 + $0xca] sm:$0x7f]
    %v311 = vld [vmem:[#allocation2 + $0xda] sm:$0xff]
    %v312 = vld [vmem:[#allocation2 + $0xe2] sm:$0x7f]
    %v313 = vld [vmem:[#allocation2 + $0xf2] sm:$0xff]
    %v314 = vld [vmem:[#allocation2 + $0xfa] sm:$0x7f]
    %v315 = vld [vmem:[#allocation2 + $0x10a] sm:$0xff]
    %v316 = vld [vmem:[#allocation2 + $0x112] sm:$0x7f]
    %v317 = vld [vmem:[#allocation2 + $0x122] sm:$0xff]
    %v318 = vld [vmem:[#allocation2 + $0x12a] sm:$0x7f]
    %v319 = vld [vmem:[#allocation2 + $0x13a] sm:$0xff]
    %v320 = vld [vmem:[#allocation2 + $0x142] sm:$0x7f]
    %v321 = vld [vmem:[#allocation2 + $0x152] sm:$0xff]
    %v322 = vld [vmem:[#allocation2 + $0x15a] sm:$0x7f]
    %v323 = vld [vmem:[#allocation2 + $0x16a] sm:$0xff]
    %v324 = vld [vmem:[#allocation2 + $0x172] sm:$0x7f]
    %v325 = vld [vmem:[#allocation2 + $0x182] sm:$0xff]
    %v326 = vld [vmem:[#allocation2 + $0x18a] sm:$0x7f]
    %v327 = vmax.f32 %v259, %v293
    %v328 = vmax.f32 %v260, %v294
    %v329 = vmax.f32 %v261, %v295
    %v330 = vmax.f32 %v262, %v296
    %v331 = vmax.f32 %v263, %v297
    %v332 = vmax.f32 %v264, %v298
    %v333 = vmax.f32 %v265, %v299
    %v334 = vmax.f32 %v266, %v300
    %v335 = vmax.f32 %v267, %v301
    %v336 = vmax.f32 %v268, %v302
    %v337 = vmax.f32 %v269, %v303
    %v338 = vmax.f32 %v270, %v304
    %v339 = vmax.f32 %v271, %v305
    %v340 = vmax.f32 %v272, %v306
    %v341 = vmax.f32 %v273, %v307
    %v342 = vmax.f32 %v274, %v308
    %v343 = vmax.f32 %v275, %v309
    %v344 = vmax.f32 %v276, %v310
    %v345 = vmax.f32 %v277, %v311
    %v346 = vmax.f32 %v278, %v312
    %v347 = vmax.f32 %v279, %v313
    %v348 = vmax.f32 %v280, %v314
    %v349 = vmax.f32 %v281, %v315
    %v350 = vmax.f32 %v282, %v316
    %v351 = vmax.f32 %v283, %v317
    %v352 = vmax.f32 %v284, %v318
    %v353 = vmax.f32 %v285, %v319
    %v354 = vmax.f32 %v286, %v320
    %v355 = vmax.f32 %v287, %v321
    %v356 = vmax.f32 %v288, %v322
    %v357 = vmax.f32 %v289, %v323
    %v358 = vmax.f32 %v290, %v324
    %v359 = vmax.f32 %v291, %v325
    %v360 = vmax.f32 %v292, %v326
    %361 = vst [vmem:[#allocation2] sm:$0xff] %v327
    %362 = vst [vmem:[#allocation2 + $0x8] sm:$0x7f] %v328
    %363 = vst [vmem:[#allocation2 + $0x18] sm:$0xff] %v329
    %364 = vst [vmem:[#allocation2 + $0x20] sm:$0x7f] %v330
    %365 = vst [vmem:[#allocation2 + $0x30] sm:$0xff] %v331
    %366 = vst [vmem:[#allocation2 + $0x38] sm:$0x7f] %v332
    %367 = vst [vmem:[#allocation2 + $0x48] sm:$0xff] %v333
    %368 = vst [vmem:[#allocation2 + $0x50] sm:$0x7f] %v334
    %369 = vst [vmem:[#allocation2 + $0x60] sm:$0xff] %v335
    %370 = vst [vmem:[#allocation2 + $0x68] sm:$0x7f] %v336
    %371 = vst [vmem:[#allocation2 + $0x78] sm:$0xff] %v337
    %372 = vst [vmem:[#allocation2 + $0x80] sm:$0x7f] %v338
    %373 = vst [vmem:[#allocation2 + $0x90] sm:$0xff] %v339
    %374 = vst [vmem:[#allocation2 + $0x98] sm:$0x7f] %v340
    %375 = vst [vmem:[#allocation2 + $0xa8] sm:$0xff] %v341
    %376 = vst [vmem:[#allocation2 + $0xb0] sm:$0x7f] %v342
    %377 = vst [vmem:[#allocation2 + $0xc0] sm:$0xff] %v343
    %378 = vst [vmem:[#allocation2 + $0xc8] sm:$0x7f] %v344
    %379 = vst [vmem:[#allocation2 + $0xd8] sm:$0xff] %v345
    %380 = vst [vmem:[#allocation2 + $0xe0] sm:$0x7f] %v346
    %381 = vst [vmem:[#allocation2 + $0xf0] sm:$0xff] %v347
    %382 = vst [vmem:[#allocation2 + $0xf8] sm:$0x7f] %v348
    %383 = vst [vmem:[#allocation2 + $0x108] sm:$0xff] %v349
    %384 = vst [vmem:[#allocation2 + $0x110] sm:$0x7f] %v350
    %385 = vst [vmem:[#allocation2 + $0x120] sm:$0xff] %v351
    %386 = vst [vmem:[#allocation2 + $0x128] sm:$0x7f] %v352
    %387 = vst [vmem:[#allocation2 + $0x138] sm:$0xff] %v353
    %388 = vst [vmem:[#allocation2 + $0x140] sm:$0x7f] %v354
    %389 = vst [vmem:[#allocation2 + $0x150] sm:$0xff] %v355
    %390 = vst [vmem:[#allocation2 + $0x158] sm:$0x7f] %v356
    %391 = vst [vmem:[#allocation2 + $0x168] sm:$0xff] %v357
    %392 = vst [vmem:[#allocation2 + $0x170] sm:$0x7f] %v358
    %393 = vst [vmem:[#allocation2 + $0x180] sm:$0xff] %v359
    %394 = vst [vmem:[#allocation2 + $0x188] sm:$0x7f] %v360
    %v395 = vld [vmem:[#allocation2] sm:$0xff]
    %v396 = vld [vmem:[#allocation2 + $0x8] sm:$0xff]
    %v397 = vld [vmem:[#allocation2 + $0x18] sm:$0xff]
    %v398 = vld [vmem:[#allocation2 + $0x20] sm:$0xff]
    %v399 = vld [vmem:[#allocation2 + $0x30] sm:$0xff]
    %v400 = vld [vmem:[#allocation2 + $0x38] sm:$0xff]
    %v401 = vld [vmem:[#allocation2 + $0x48] sm:$0xff]
    %v402 = vld [vmem:[#allocation2 + $0x50] sm:$0xff]
    %v403 = vld [vmem:[#allocation2 + $0x60] sm:$0xff]
    %v404 = vld [vmem:[#allocation2 + $0x68] sm:$0xff]
    %v405 = vld [vmem:[#allocation2 + $0x78] sm:$0xff]
    %v406 = vld [vmem:[#allocation2 + $0x80] sm:$0xff]
    %v407 = vld [vmem:[#allocation2 + $0x90] sm:$0xff]
    %v408 = vld [vmem:[#allocation2 + $0x98] sm:$0xff]
    %v409 = vld [vmem:[#allocation2 + $0xa8] sm:$0xff]
    %v410 = vld [vmem:[#allocation2 + $0xb0] sm:$0xff]
    %v411 = vld [vmem:[#allocation2 + $0xc0] sm:$0xff]
    %v412 = vld [vmem:[#allocation2 + $0xc8] sm:$0xff]
    %v413 = vld [vmem:[#allocation2 + $0xd8] sm:$0xff]
    %v414 = vld [vmem:[#allocation2 + $0xe0] sm:$0xff]
    %v415 = vld [vmem:[#allocation2 + $0xf0] sm:$0xff]
    %v416 = vld [vmem:[#allocation2 + $0xf8] sm:$0xff]
    %v417 = vld [vmem:[#allocation2 + $0x108] sm:$0xff]
    %v418 = vld [vmem:[#allocation2 + $0x110] sm:$0xff]
    %v419 = vld [vmem:[#allocation2 + $0x120] sm:$0xff]
    %v420 = vld [vmem:[#allocation2 + $0x128] sm:$0xff]
    %v421 = vld [vmem:[#allocation2 + $0x138] sm:$0xff]
    %v422 = vld [vmem:[#allocation2 + $0x140] sm:$0xff]
    %v423 = vld [vmem:[#allocation2 + $0x150] sm:$0xff]
    %v424 = vld [vmem:[#allocation2 + $0x158] sm:$0xff]
    %v425 = vld [vmem:[#allocation2 + $0x168] sm:$0xff]
    %v426 = vld [vmem:[#allocation2 + $0x170] sm:$0xff]
    %v427 = vld [vmem:[#allocation2 + $0x180] sm:$0xff]
    %v428 = vld [vmem:[#allocation2 + $0x188] sm:$0xff]
    %v429 = vld [vmem:[#allocation2 + $0x1] sm:$0xff]
    %v430 = vld [vmem:[#allocation2 + $0x9] sm:$0xff]
    %v431 = vld [vmem:[#allocation2 + $0x19] sm:$0xff]
    %v432 = vld [vmem:[#allocation2 + $0x21] sm:$0xff]
    %v433 = vld [vmem:[#allocation2 + $0x31] sm:$0xff]
    %v434 = vld [vmem:[#allocation2 + $0x39] sm:$0xff]
    %v435 = vld [vmem:[#allocation2 + $0x49] sm:$0xff]
    %v436 = vld [vmem:[#allocation2 + $0x51] sm:$0xff]
    %v437 = vld [vmem:[#allocation2 + $0x61] sm:$0xff]
    %v438 = vld [vmem:[#allocation2 + $0x69] sm:$0xff]
    %v439 = vld [vmem:[#allocation2 + $0x79] sm:$0xff]
    %v440 = vld [vmem:[#allocation2 + $0x81] sm:$0xff]
    %v441 = vld [vmem:[#allocation2 + $0x91] sm:$0xff]
    %v442 = vld [vmem:[#allocation2 + $0x99] sm:$0xff]
    %v443 = vld [vmem:[#allocation2 + $0xa9] sm:$0xff]
    %v444 = vld [vmem:[#allocation2 + $0xb1] sm:$0xff]
    %v445 = vld [vmem:[#allocation2 + $0xc1] sm:$0xff]
    %v446 = vld [vmem:[#allocation2 + $0xc9] sm:$0xff]
    %v447 = vld [vmem:[#allocation2 + $0xd9] sm:$0xff]
    %v448 = vld [vmem:[#allocation2 + $0xe1] sm:$0xff]
    %v449 = vld [vmem:[#allocation2 + $0xf1] sm:$0xff]
    %v450 = vld [vmem:[#allocation2 + $0xf9] sm:$0xff]
    %v451 = vld [vmem:[#allocation2 + $0x109] sm:$0xff]
    %v452 = vld [vmem:[#allocation2 + $0x111] sm:$0xff]
    %v453 = vld [vmem:[#allocation2 + $0x121] sm:$0xff]
    %v454 = vld [vmem:[#allocation2 + $0x129] sm:$0xff]
    %v455 = vld [vmem:[#allocation2 + $0x139] sm:$0xff]
    %v456 = vld [vmem:[#allocation2 + $0x141] sm:$0xff]
    %v457 = vld [vmem:[#allocation2 + $0x151] sm:$0xff]
    %v458 = vld [vmem:[#allocation2 + $0x159] sm:$0xff]
    %v459 = vld [vmem:[#allocation2 + $0x169] sm:$0xff]
    %v460 = vld [vmem:[#allocation2 + $0x171] sm:$0xff]
    %v461 = vld [vmem:[#allocation2 + $0x181] sm:$0xff]
    %v462 = vld [vmem:[#allocation2 + $0x189] sm:$0xff]
    %v463 = vmax.f32 %v395, %v429
    %v464 = vmax.f32 %v396, %v430
    %v465 = vmax.f32 %v397, %v431
    %v466 = vmax.f32 %v398, %v432
    %v467 = vmax.f32 %v399, %v433
    %v468 = vmax.f32 %v400, %v434
    %v469 = vmax.f32 %v401, %v435
    %v470 = vmax.f32 %v402, %v436
    %v471 = vmax.f32 %v403, %v437
    %v472 = vmax.f32 %v404, %v438
    %v473 = vmax.f32 %v405, %v439
    %v474 = vmax.f32 %v406, %v440
    %v475 = vmax.f32 %v407, %v441
    %v476 = vmax.f32 %v408, %v442
    %v477 = vmax.f32 %v409, %v443
    %v478 = vmax.f32 %v410, %v444
    %v479 = vmax.f32 %v411, %v445
    %v480 = vmax.f32 %v412, %v446
    %v481 = vmax.f32 %v413, %v447
    %v482 = vmax.f32 %v414, %v448
    %v483 = vmax.f32 %v415, %v449
    %v484 = vmax.f32 %v416, %v450
    %v485 = vmax.f32 %v417, %v451
    %v486 = vmax.f32 %v418, %v452
    %v487 = vmax.f32 %v419, %v453
    %v488 = vmax.f32 %v420, %v454
    %v489 = vmax.f32 %v421, %v455
    %v490 = vmax.f32 %v422, %v456
    %v491 = vmax.f32 %v423, %v457
    %v492 = vmax.f32 %v424, %v458
    %v493 = vmax.f32 %v425, %v459
    %v494 = vmax.f32 %v426, %v460
    %v495 = vmax.f32 %v427, %v461
    %v496 = vmax.f32 %v428, %v462
    %497 = vst [vmem:[#allocation2] sm:$0xff] %v463
    %498 = vst [vmem:[#allocation2 + $0x8] sm:$0xff] %v464
    %499 = vst [vmem:[#allocation2 + $0x18] sm:$0xff] %v465
    %500 = vst [vmem:[#allocation2 + $0x20] sm:$0xff] %v466
    %501 = vst [vmem:[#allocation2 + $0x30] sm:$0xff] %v467
    %502 = vst [vmem:[#allocation2 + $0x38] sm:$0xff] %v468
    %503 = vst [vmem:[#allocation2 + $0x48] sm:$0xff] %v469
    %504 = vst [vmem:[#allocation2 + $0x50] sm:$0xff] %v470
    %505 = vst [vmem:[#allocation2 + $0x60] sm:$0xff] %v471
    %506 = vst [vmem:[#allocation2 + $0x68] sm:$0xff] %v472
    %507 = vst [vmem:[#allocation2 + $0x78] sm:$0xff] %v473
    %508 = vst [vmem:[#allocation2 + $0x80] sm:$0xff] %v474
    %509 = vst [vmem:[#allocation2 + $0x90] sm:$0xff] %v475
    %510 = vst [vmem:[#allocation2 + $0x98] sm:$0xff] %v476
    %511 = vst [vmem:[#allocation2 + $0xa8] sm:$0xff] %v477
    %512 = vst [vmem:[#allocation2 + $0xb0] sm:$0xff] %v478
    %513 = vst [vmem:[#allocation2 + $0xc0] sm:$0xff] %v479
    %514 = vst [vmem:[#allocation2 + $0xc8] sm:$0xff] %v480
    %515 = vst [vmem:[#allocation2 + $0xd8] sm:$0xff] %v481
    %516 = vst [vmem:[#allocation2 + $0xe0] sm:$0xff] %v482
    %517 = vst [vmem:[#allocation2 + $0xf0] sm:$0xff] %v483
    %518 = vst [vmem:[#allocation2 + $0xf8] sm:$0xff] %v484
    %519 = vst [vmem:[#allocation2 + $0x108] sm:$0xff] %v485
    %520 = vst [vmem:[#allocation2 + $0x110] sm:$0xff] %v486
    %521 = vst [vmem:[#allocation2 + $0x120] sm:$0xff] %v487
    %522 = vst [vmem:[#allocation2 + $0x128] sm:$0xff] %v488
    %523 = vst [vmem:[#allocation2 + $0x138] sm:$0xff] %v489
    %524 = vst [vmem:[#allocation2 + $0x140] sm:$0xff] %v490
    %525 = vst [vmem:[#allocation2 + $0x150] sm:$0xff] %v491
    %526 = vst [vmem:[#allocation2 + $0x158] sm:$0xff] %v492
    %527 = vst [vmem:[#allocation2 + $0x168] sm:$0xff] %v493
    %528 = vst [vmem:[#allocation2 + $0x170] sm:$0xff] %v494
    %529 = vst [vmem:[#allocation2 + $0x180] sm:$0xff] %v495
    %530 = vst [vmem:[#allocation2 + $0x188] sm:$0xff] %v496
    %v531 = vld [vmem:[#allocation2] sm:$0xff]
    %v532 = vld [vmem:[#allocation2 + $0x8] sm:$0xff]
    %v533 = vld [vmem:[#allocation2 + $0x10] sm:$0x1]
    %v534 = vld [vmem:[#allocation2 + $0x18] sm:$0xff]
    %v535 = vld [vmem:[#allocation2 + $0x20] sm:$0xff]
    %v536 = vld [vmem:[#allocation2 + $0x28] sm:$0x1]
    %v537 = vld [vmem:[#allocation2 + $0x30] sm:$0xff]
    %v538 = vld [vmem:[#allocation2 + $0x38] sm:$0xff]
    %v539 = vld [vmem:[#allocation2 + $0x40] sm:$0x1]
    %v540 = vld [vmem:[#allocation2 + $0x48] sm:$0xff]
    %v541 = vld [vmem:[#allocation2 + $0x50] sm:$0xff]
    %v542 = vld [vmem:[#allocation2 + $0x58] sm:$0x1]
    %v543 = vld [vmem:[#allocation2 + $0x60] sm:$0xff]
    %v544 = vld [vmem:[#allocation2 + $0x68] sm:$0xff]
    %v545 = vld [vmem:[#allocation2 + $0x70] sm:$0x1]
    %v546 = vld [vmem:[#allocation2 + $0x78] sm:$0xff]
    %v547 = vld [vmem:[#allocation2 + $0x80] sm:$0xff]
    %v548 = vld [vmem:[#allocation2 + $0x88] sm:$0x1]
    %v549 = vld [vmem:[#allocation2 + $0x90] sm:$0xff]
    %v550 = vld [vmem:[#allocation2 + $0x98] sm:$0xff]
    %v551 = vld [vmem:[#allocation2 + $0xa0] sm:$0x1]
    %v552 = vld [vmem:[#allocation2 + $0xa8] sm:$0xff]
    %v553 = vld [vmem:[#allocation2 + $0xb0] sm:$0xff]
    %v554 = vld [vmem:[#allocation2 + $0xb8] sm:$0x1]
    %v555 = vld [vmem:[#allocation2 + $0xc0] sm:$0xff]
    %v556 = vld [vmem:[#allocation2 + $0xc8] sm:$0xff]
    %v557 = vld [vmem:[#allocation2 + $0xd0] sm:$0x1]
    %v558 = vld [vmem:[#allocation2 + $0xd8] sm:$0xff]
    %v559 = vld [vmem:[#allocation2 + $0xe0] sm:$0xff]
    %v560 = vld [vmem:[#allocation2 + $0xe8] sm:$0x1]
    %v561 = vld [vmem:[#allocation2 + $0xf0] sm:$0xff]
    %v562 = vld [vmem:[#allocation2 + $0xf8] sm:$0xff]
    %v563 = vld [vmem:[#allocation2 + $0x100] sm:$0x1]
    %v564 = vld [vmem:[#allocation2 + $0x108] sm:$0xff]
    %v565 = vld [vmem:[#allocation2 + $0x110] sm:$0xff]
    %v566 = vld [vmem:[#allocation2 + $0x118] sm:$0x1]
    %v567 = vld [vmem:[#allocation2 + $0x120] sm:$0xff]
    %v568 = vld [vmem:[#allocation2 + $0x128] sm:$0xff]
    %v569 = vld [vmem:[#allocation2 + $0x130] sm:$0x1]
    %v570 = vld [vmem:[#allocation2 + $0x138] sm:$0xff]
    %v571 = vld [vmem:[#allocation2 + $0x140] sm:$0xff]
    %v572 = vld [vmem:[#allocation2 + $0x148] sm:$0x1]
    %v573 = vld [vmem:[#allocation2 + $0x150] sm:$0xff]
    %v574 = vld [vmem:[#allocation2 + $0x158] sm:$0xff]
    %v575 = vld [vmem:[#allocation2 + $0x160] sm:$0x1]
    %v576 = vld [vmem:[#allocation2 + $0x168] sm:$0xff]
    %v577 = vld [vmem:[#allocation2 + $0x170] sm:$0xff]
    %v578 = vld [vmem:[#allocation2 + $0x178] sm:$0x1]
    %s579 = scalar_lea.vmem [#allocation2], 24
    %v580 = vld [vmem:[%s579] sm:$0xff]
    %v581 = vld [vmem:[%s579 + $0x8] sm:$0xff]
    %v582 = vld [vmem:[%s579 + $0x10] sm:$0x1]
    %v583 = vld [vmem:[%s579 + $0x18] sm:$0xff]
    %v584 = vld [vmem:[%s579 + $0x20] sm:$0xff]
    %v585 = vld [vmem:[%s579 + $0x28] sm:$0x1]
    %v586 = vld [vmem:[%s579 + $0x30] sm:$0xff]
    %v587 = vld [vmem:[%s579 + $0x38] sm:$0xff]
    %v588 = vld [vmem:[%s579 + $0x40] sm:$0x1]
    %v589 = vld [vmem:[%s579 + $0x48] sm:$0xff]
    %v590 = vld [vmem:[%s579 + $0x50] sm:$0xff]
    %v591 = vld [vmem:[%s579 + $0x58] sm:$0x1]
    %v592 = vld [vmem:[%s579 + $0x60] sm:$0xff]
    %v593 = vld [vmem:[%s579 + $0x68] sm:$0xff]
    %v594 = vld [vmem:[%s579 + $0x70] sm:$0x1]
    %v595 = vld [vmem:[%s579 + $0x78] sm:$0xff]
    %v596 = vld [vmem:[%s579 + $0x80] sm:$0xff]
    %v597 = vld [vmem:[%s579 + $0x88] sm:$0x1]
    %v598 = vld [vmem:[%s579 + $0x90] sm:$0xff]
    %v599 = vld [vmem:[%s579 + $0x98] sm:$0xff]
    %v600 = vld [vmem:[%s579 + $0xa0] sm:$0x1]
    %v601 = vld [vmem:[%s579 + $0xa8] sm:$0xff]
    %v602 = vld [vmem:[%s579 + $0xb0] sm:$0xff]
    %v603 = vld [vmem:[%s579 + $0xb8] sm:$0x1]
    %v604 = vld [vmem:[%s579 + $0xc0] sm:$0xff]
    %v605 = vld [vmem:[%s579 + $0xc8] sm:$0xff]
    %v606 = vld [vmem:[%s579 + $0xd0] sm:$0x1]
    %v607 = vld [vmem:[%s579 + $0xd8] sm:$0xff]
    %v608 = vld [vmem:[%s579 + $0xe0] sm:$0xff]
    %v609 = vld [vmem:[%s579 + $0xe8] sm:$0x1]
    %v610 = vld [vmem:[%s579 + $0xf0] sm:$0xff]
    %v611 = vld [vmem:[%s579 + $0xf8] sm:$0xff]
    %v612 = vld [vmem:[%s579 + $0x100] sm:$0x1]
    %v613 = vld [vmem:[%s579 + $0x108] sm:$0xff]
    %v614 = vld [vmem:[%s579 + $0x110] sm:$0xff]
    %v615 = vld [vmem:[%s579 + $0x118] sm:$0x1]
    %v616 = vld [vmem:[%s579 + $0x120] sm:$0xff]
    %v617 = vld [vmem:[%s579 + $0x128] sm:$0xff]
    %v618 = vld [vmem:[%s579 + $0x130] sm:$0x1]
    %v619 = vld [vmem:[%s579 + $0x138] sm:$0xff]
    %v620 = vld [vmem:[%s579 + $0x140] sm:$0xff]
    %v621 = vld [vmem:[%s579 + $0x148] sm:$0x1]
    %v622 = vld [vmem:[%s579 + $0x150] sm:$0xff]
    %v623 = vld [vmem:[%s579 + $0x158] sm:$0xff]
    %v624 = vld [vmem:[%s579 + $0x160] sm:$0x1]
    %v625 = vld [vmem:[%s579 + $0x168] sm:$0xff]
    %v626 = vld [vmem:[%s579 + $0x170] sm:$0xff]
    %v627 = vld [vmem:[%s579 + $0x178] sm:$0x1]
    %v628 = vmax.f32 %v531, %v580
    %v629 = vmax.f32 %v532, %v581
    %v630 = vmax.f32 %v533, %v582
    %v631 = vmax.f32 %v534, %v583
    %v632 = vmax.f32 %v535, %v584
    %v633 = vmax.f32 %v536, %v585
    %v634 = vmax.f32 %v537, %v586
    %v635 = vmax.f32 %v538, %v587
    %v636 = vmax.f32 %v539, %v588
    %v637 = vmax.f32 %v540, %v589
    %v638 = vmax.f32 %v541, %v590
    %v639 = vmax.f32 %v542, %v591
    %v640 = vmax.f32 %v543, %v592
    %v641 = vmax.f32 %v544, %v593
    %v642 = vmax.f32 %v545, %v594
    %v643 = vmax.f32 %v546, %v595
    %v644 = vmax.f32 %v547, %v596
    %v645 = vmax.f32 %v548, %v597
    %v646 = vmax.f32 %v549, %v598
    %v647 = vmax.f32 %v550, %v599
    %v648 = vmax.f32 %v551, %v600
    %v649 = vmax.f32 %v552, %v601
    %v650 = vmax.f32 %v553, %v602
    %v651 = vmax.f32 %v554, %v603
    %v652 = vmax.f32 %v555, %v604
    %v653 = vmax.f32 %v556, %v605
    %v654 = vmax.f32 %v557, %v606
    %v655 = vmax.f32 %v558, %v607
    %v656 = vmax.f32 %v559, %v608
    %v657 = vmax.f32 %v560, %v609
    %v658 = vmax.f32 %v561, %v610
    %v659 = vmax.f32 %v562, %v611
    %v660 = vmax.f32 %v563, %v612
    %v661 = vmax.f32 %v564, %v613
    %v662 = vmax.f32 %v565, %v614
    %v663 = vmax.f32 %v566, %v615
    %v664 = vmax.f32 %v567, %v616
    %v665 = vmax.f32 %v568, %v617
    %v666 = vmax.f32 %v569, %v618
    %v667 = vmax.f32 %v570, %v619
    %v668 = vmax.f32 %v571, %v620
    %v669 = vmax.f32 %v572, %v621
    %v670 = vmax.f32 %v573, %v622
    %v671 = vmax.f32 %v574, %v623
    %v672 = vmax.f32 %v575, %v624
    %v673 = vmax.f32 %v576, %v625
    %v674 = vmax.f32 %v577, %v626
    %v675 = vmax.f32 %v578, %v627
    %676 = vst [vmem:[#allocation2] sm:$0xff] %v628
    %677 = vst [vmem:[#allocation2 + $0x8] sm:$0xff] %v629
    %678 = vst [vmem:[#allocation2 + $0x10] sm:$0x1] %v630
    %679 = vst [vmem:[#allocation2 + $0x18] sm:$0xff] %v631
    %680 = vst [vmem:[#allocation2 + $0x20] sm:$0xff] %v632
    %681 = vst [vmem:[#allocation2 + $0x28] sm:$0x1] %v633
    %682 = vst [vmem:[#allocation2 + $0x30] sm:$0xff] %v634
    %683 = vst [vmem:[#allocation2 + $0x38] sm:$0xff] %v635
    %684 = vst [vmem:[#allocation2 + $0x40] sm:$0x1] %v636
    %685 = vst [vmem:[#allocation2 + $0x48] sm:$0xff] %v637
    %686 = vst [vmem:[#allocation2 + $0x50] sm:$0xff] %v638
    %687 = vst [vmem:[#allocation2 + $0x58] sm:$0x1] %v639
    %688 = vst [vmem:[#allocation2 + $0x60] sm:$0xff] %v640
    %689 = vst [vmem:[#allocation2 + $0x68] sm:$0xff] %v641
    %690 = vst [vmem:[#allocation2 + $0x70] sm:$0x1] %v642
    %691 = vst [vmem:[#allocation2 + $0x78] sm:$0xff] %v643
    %692 = vst [vmem:[#allocation2 + $0x80] sm:$0xff] %v644
    %693 = vst [vmem:[#allocation2 + $0x88] sm:$0x1] %v645
    %694 = vst [vmem:[#allocation2 + $0x90] sm:$0xff] %v646
    %695 = vst [vmem:[#allocation2 + $0x98] sm:$0xff] %v647
    %696 = vst [vmem:[#allocation2 + $0xa0] sm:$0x1] %v648
    %697 = vst [vmem:[#allocation2 + $0xa8] sm:$0xff] %v649
    %698 = vst [vmem:[#allocation2 + $0xb0] sm:$0xff] %v650
    %699 = vst [vmem:[#allocation2 + $0xb8] sm:$0x1] %v651
    %700 = vst [vmem:[#allocation2 + $0xc0] sm:$0xff] %v652
    %701 = vst [vmem:[#allocation2 + $0xc8] sm:$0xff] %v653
    %702 = vst [vmem:[#allocation2 + $0xd0] sm:$0x1] %v654
    %703 = vst [vmem:[#allocation2 + $0xd8] sm:$0xff] %v655
    %704 = vst [vmem:[#allocation2 + $0xe0] sm:$0xff] %v656
    %705 = vst [vmem:[#allocation2 + $0xe8] sm:$0x1] %v657
    %706 = vst [vmem:[#allocation2 + $0xf0] sm:$0xff] %v658
    %707 = vst [vmem:[#allocation2 + $0xf8] sm:$0xff] %v659
    %708 = vst [vmem:[#allocation2 + $0x100] sm:$0x1] %v660
    %709 = vst [vmem:[#allocation2 + $0x108] sm:$0xff] %v661
    %710 = vst [vmem:[#allocation2 + $0x110] sm:$0xff] %v662
    %711 = vst [vmem:[#allocation2 + $0x118] sm:$0x1] %v663
    %712 = vst [vmem:[#allocation2 + $0x120] sm:$0xff] %v664
    %713 = vst [vmem:[#allocation2 + $0x128] sm:$0xff] %v665
    %714 = vst [vmem:[#allocation2 + $0x130] sm:$0x1] %v666
    %715 = vst [vmem:[#allocation2 + $0x138] sm:$0xff] %v667
    %716 = vst [vmem:[#allocation2 + $0x140] sm:$0xff] %v668
    %717 = vst [vmem:[#allocation2 + $0x148] sm:$0x1] %v669
    %718 = vst [vmem:[#allocation2 + $0x150] sm:$0xff] %v670
    %719 = vst [vmem:[#allocation2 + $0x158] sm:$0xff] %v671
    %720 = vst [vmem:[#allocation2 + $0x160] sm:$0x1] %v672
    %721 = vst [vmem:[#allocation2 + $0x168] sm:$0xff] %v673
    %722 = vst [vmem:[#allocation2 + $0x170] sm:$0xff] %v674
    %723 = vst [vmem:[#allocation2 + $0x178] sm:$0x1] %v675
    %v724 = vld [vmem:[#allocation2] sm:$0xff]
    %v725 = vld [vmem:[#allocation2 + $0x8] sm:$0xff]
    %v726 = vld [vmem:[#allocation2 + $0x10] sm:$0x1]
    %v727 = vld [vmem:[#allocation2 + $0x18] sm:$0xff]
    %v728 = vld [vmem:[#allocation2 + $0x20] sm:$0xff]
    %v729 = vld [vmem:[#allocation2 + $0x28] sm:$0x1]
    %v730 = vld [vmem:[#allocation2 + $0x30] sm:$0xff]
    %v731 = vld [vmem:[#allocation2 + $0x38] sm:$0xff]
    %v732 = vld [vmem:[#allocation2 + $0x40] sm:$0x1]
    %v733 = vld [vmem:[#allocation2 + $0x48] sm:$0xff]
    %v734 = vld [vmem:[#allocation2 + $0x50] sm:$0xff]
    %v735 = vld [vmem:[#allocation2 + $0x58] sm:$0x1]
    %v736 = vld [vmem:[#allocation2 + $0x60] sm:$0xff]
    %v737 = vld [vmem:[#allocation2 + $0x68] sm:$0xff]
    %v738 = vld [vmem:[#allocation2 + $0x70] sm:$0x1]
    %v739 = vld [vmem:[#allocation2 + $0x78] sm:$0xff]
    %v740 = vld [vmem:[#allocation2 + $0x80] sm:$0xff]
    %v741 = vld [vmem:[#allocation2 + $0x88] sm:$0x1]
    %v742 = vld [vmem:[#allocation2 + $0x90] sm:$0xff]
    %v743 = vld [vmem:[#allocation2 + $0x98] sm:$0xff]
    %v744 = vld [vmem:[#allocation2 + $0xa0] sm:$0x1]
    %v745 = vld [vmem:[#allocation2 + $0xa8] sm:$0xff]
    %v746 = vld [vmem:[#allocation2 + $0xb0] sm:$0xff]
    %v747 = vld [vmem:[#allocation2 + $0xb8] sm:$0x1]
    %v748 = vld [vmem:[#allocation2 + $0xc0] sm:$0xff]
    %v749 = vld [vmem:[#allocation2 + $0xc8] sm:$0xff]
    %v750 = vld [vmem:[#allocation2 + $0xd0] sm:$0x1]
    %v751 = vld [vmem:[#allocation2 + $0xd8] sm:$0xff]
    %v752 = vld [vmem:[#allocation2 + $0xe0] sm:$0xff]
    %v753 = vld [vmem:[#allocation2 + $0xe8] sm:$0x1]
    %v754 = vld [vmem:[#allocation2 + $0xf0] sm:$0xff]
    %v755 = vld [vmem:[#allocation2 + $0xf8] sm:$0xff]
    %v756 = vld [vmem:[#allocation2 + $0x100] sm:$0x1]
    %v757 = vld [vmem:[#allocation2 + $0x108] sm:$0xff]
    %v758 = vld [vmem:[#allocation2 + $0x110] sm:$0xff]
    %v759 = vld [vmem:[#allocation2 + $0x118] sm:$0x1]
    %v760 = vld [vmem:[#allocation2 + $0x120] sm:$0xff]
    %v761 = vld [vmem:[#allocation2 + $0x128] sm:$0xff]
    %v762 = vld [vmem:[#allocation2 + $0x130] sm:$0x1]
    %v763 = vld [vmem:[#allocation2 + $0x138] sm:$0xff]
    %v764 = vld [vmem:[#allocation2 + $0x140] sm:$0xff]
    %v765 = vld [vmem:[#allocation2 + $0x148] sm:$0x1]
    %v766 = vld [vmem:[#allocation2 + $0x150] sm:$0xff]
    %v767 = vld [vmem:[#allocation2 + $0x158] sm:$0xff]
    %v768 = vld [vmem:[#allocation2 + $0x160] sm:$0x1]
    %v769 = vld [vmem:[%s49] sm:$0xff]
    %v770 = vld [vmem:[%s49 + $0x8] sm:$0xff]
    %v771 = vld [vmem:[%s49 + $0x10] sm:$0x1]
    %v772 = vld [vmem:[%s49 + $0x18] sm:$0xff]
    %v773 = vld [vmem:[%s49 + $0x20] sm:$0xff]
    %v774 = vld [vmem:[%s49 + $0x28] sm:$0x1]
    %v775 = vld [vmem:[%s49 + $0x30] sm:$0xff]
    %v776 = vld [vmem:[%s49 + $0x38] sm:$0xff]
    %v777 = vld [vmem:[%s49 + $0x40] sm:$0x1]
    %v778 = vld [vmem:[%s49 + $0x48] sm:$0xff]
    %v779 = vld [vmem:[%s49 + $0x50] sm:$0xff]
    %v780 = vld [vmem:[%s49 + $0x58] sm:$0x1]
    %v781 = vld [vmem:[%s49 + $0x60] sm:$0xff]
    %v782 = vld [vmem:[%s49 + $0x68] sm:$0xff]
    %v783 = vld [vmem:[%s49 + $0x70] sm:$0x1]
    %v784 = vld [vmem:[%s49 + $0x78] sm:$0xff]
    %v785 = vld [vmem:[%s49 + $0x80] sm:$0xff]
    %v786 = vld [vmem:[%s49 + $0x88] sm:$0x1]
    %v787 = vld [vmem:[%s49 + $0x90] sm:$0xff]
    %v788 = vld [vmem:[%s49 + $0x98] sm:$0xff]
    %v789 = vld [vmem:[%s49 + $0xa0] sm:$0x1]
    %v790 = vld [vmem:[%s49 + $0xa8] sm:$0xff]
    %v791 = vld [vmem:[%s49 + $0xb0] sm:$0xff]
    %v792 = vld [vmem:[%s49 + $0xb8] sm:$0x1]
    %v793 = vld [vmem:[%s49 + $0xc0] sm:$0xff]
    %v794 = vld [vmem:[%s49 + $0xc8] sm:$0xff]
    %v795 = vld [vmem:[%s49 + $0xd0] sm:$0x1]
    %v796 = vld [vmem:[%s49 + $0xd8] sm:$0xff]
    %v797 = vld [vmem:[%s49 + $0xe0] sm:$0xff]
    %v798 = vld [vmem:[%s49 + $0xe8] sm:$0x1]
    %v799 = vld [vmem:[%s49 + $0xf0] sm:$0xff]
    %v800 = vld [vmem:[%s49 + $0xf8] sm:$0xff]
    %v801 = vld [vmem:[%s49 + $0x100] sm:$0x1]
    %v802 = vld [vmem:[%s49 + $0x108] sm:$0xff]
    %v803 = vld [vmem:[%s49 + $0x110] sm:$0xff]
    %v804 = vld [vmem:[%s49 + $0x118] sm:$0x1]
    %v805 = vld [vmem:[%s49 + $0x120] sm:$0xff]
    %v806 = vld [vmem:[%s49 + $0x128] sm:$0xff]
    %v807 = vld [vmem:[%s49 + $0x130] sm:$0x1]
    %v808 = vld [vmem:[%s49 + $0x138] sm:$0xff]
    %v809 = vld [vmem:[%s49 + $0x140] sm:$0xff]
    %v810 = vld [vmem:[%s49 + $0x148] sm:$0x1]
    %v811 = vld [vmem:[%s49 + $0x150] sm:$0xff]
    %v812 = vld [vmem:[%s49 + $0x158] sm:$0xff]
    %v813 = vld [vmem:[%s49 + $0x160] sm:$0x1]
    %v814 = vmax.f32 %v724, %v769
    %v815 = vmax.f32 %v725, %v770
    %v816 = vmax.f32 %v726, %v771
    %v817 = vmax.f32 %v727, %v772
    %v818 = vmax.f32 %v728, %v773
    %v819 = vmax.f32 %v729, %v774
    %v820 = vmax.f32 %v730, %v775
    %v821 = vmax.f32 %v731, %v776
    %v822 = vmax.f32 %v732, %v777
    %v823 = vmax.f32 %v733, %v778
    %v824 = vmax.f32 %v734, %v779
    %v825 = vmax.f32 %v735, %v780
    %v826 = vmax.f32 %v736, %v781
    %v827 = vmax.f32 %v737, %v782
    %v828 = vmax.f32 %v738, %v783
    %v829 = vmax.f32 %v739, %v784
    %v830 = vmax.f32 %v740, %v785
    %v831 = vmax.f32 %v741, %v786
    %v832 = vmax.f32 %v742, %v787
    %v833 = vmax.f32 %v743, %v788
    %v834 = vmax.f32 %v744, %v789
    %v835 = vmax.f32 %v745, %v790
    %v836 = vmax.f32 %v746, %v791
    %v837 = vmax.f32 %v747, %v792
    %v838 = vmax.f32 %v748, %v793
    %v839 = vmax.f32 %v749, %v794
    %v840 = vmax.f32 %v750, %v795
    %v841 = vmax.f32 %v751, %v796
    %v842 = vmax.f32 %v752, %v797
    %v843 = vmax.f32 %v753, %v798
    %v844 = vmax.f32 %v754, %v799
    %v845 = vmax.f32 %v755, %v800
    %v846 = vmax.f32 %v756, %v801
    %v847 = vmax.f32 %v757, %v802
    %v848 = vmax.f32 %v758, %v803
    %v849 = vmax.f32 %v759, %v804
    %v850 = vmax.f32 %v760, %v805
    %v851 = vmax.f32 %v761, %v806
    %v852 = vmax.f32 %v762, %v807
    %v853 = vmax.f32 %v763, %v808
    %v854 = vmax.f32 %v764, %v809
    %v855 = vmax.f32 %v765, %v810
    %v856 = vmax.f32 %v766, %v811
    %v857 = vmax.f32 %v767, %v812
    %v858 = vmax.f32 %v768, %v813
    %859 = vst [vmem:[#allocation2] sm:$0xff] %v814
    %860 = vst [vmem:[#allocation2 + $0x8] sm:$0xff] %v815
    %861 = vst [vmem:[#allocation2 + $0x10] sm:$0x1] %v816
    %862 = vst [vmem:[#allocation2 + $0x18] sm:$0xff] %v817
    %863 = vst [vmem:[#allocation2 + $0x20] sm:$0xff] %v818
    %864 = vst [vmem:[#allocation2 + $0x28] sm:$0x1] %v819
    %865 = vst [vmem:[#allocation2 + $0x30] sm:$0xff] %v820
    %866 = vst [vmem:[#allocation2 + $0x38] sm:$0xff] %v821
    %867 = vst [vmem:[#allocation2 + $0x40] sm:$0x1] %v822
    %868 = vst [vmem:[#allocation2 + $0x48] sm:$0xff] %v823
    %869 = vst [vmem:[#allocation2 + $0x50] sm:$0xff] %v824
    %870 = vst [vmem:[#allocation2 + $0x58] sm:$0x1] %v825
    %871 = vst [vmem:[#allocation2 + $0x60] sm:$0xff] %v826
    %872 = vst [vmem:[#allocation2 + $0x68] sm:$0xff] %v827
    %873 = vst [vmem:[#allocation2 + $0x70] sm:$0x1] %v828
    %874 = vst [vmem:[#allocation2 + $0x78] sm:$0xff] %v829
    %875 = vst [vmem:[#allocation2 + $0x80] sm:$0xff] %v830
    %876 = vst [vmem:[#allocation2 + $0x88] sm:$0x1] %v831
    %877 = vst [vmem:[#allocation2 + $0x90] sm:$0xff] %v832
    %878 = vst [vmem:[#allocation2 + $0x98] sm:$0xff] %v833
    %879 = vst [vmem:[#allocation2 + $0xa0] sm:$0x1] %v834
    %880 = vst [vmem:[#allocation2 + $0xa8] sm:$0xff] %v835
    %881 = vst [vmem:[#allocation2 + $0xb0] sm:$0xff] %v836
    %882 = vst [vmem:[#allocation2 + $0xb8] sm:$0x1] %v837
    %883 = vst [vmem:[#allocation2 + $0xc0] sm:$0xff] %v838
    %884 = vst [vmem:[#allocation2 + $0xc8] sm:$0xff] %v839
    %885 = vst [vmem:[#allocation2 + $0xd0] sm:$0x1] %v840
    %886 = vst [vmem:[#allocation2 + $0xd8] sm:$0xff] %v841
    %887 = vst [vmem:[#allocation2 + $0xe0] sm:$0xff] %v842
    %888 = vst [vmem:[#allocation2 + $0xe8] sm:$0x1] %v843
    %889 = vst [vmem:[#allocation2 + $0xf0] sm:$0xff] %v844
    %890 = vst [vmem:[#allocation2 + $0xf8] sm:$0xff] %v845
    %891 = vst [vmem:[#allocation2 + $0x100] sm:$0x1] %v846
    %892 = vst [vmem:[#allocation2 + $0x108] sm:$0xff] %v847
    %893 = vst [vmem:[#allocation2 + $0x110] sm:$0xff] %v848
    %894 = vst [vmem:[#allocation2 + $0x118] sm:$0x1] %v849
    %895 = vst [vmem:[#allocation2 + $0x120] sm:$0xff] %v850
    %896 = vst [vmem:[#allocation2 + $0x128] sm:$0xff] %v851
    %897 = vst [vmem:[#allocation2 + $0x130] sm:$0x1] %v852
    %898 = vst [vmem:[#allocation2 + $0x138] sm:$0xff] %v853
    %899 = vst [vmem:[#allocation2 + $0x140] sm:$0xff] %v854
    %900 = vst [vmem:[#allocation2 + $0x148] sm:$0x1] %v855
    %901 = vst [vmem:[#allocation2 + $0x150] sm:$0xff] %v856
    %902 = vst [vmem:[#allocation2 + $0x158] sm:$0xff] %v857
    %903 = vst [vmem:[#allocation2 + $0x160] sm:$0x1] %v858
    %v904 = vld [vmem:[#allocation2] sm:$0xff]
    %v905 = vld [vmem:[#allocation2 + $0x8] sm:$0xff]
    %v906 = vld [vmem:[#allocation2 + $0x10] sm:$0x1]
    %v907 = vld [vmem:[#allocation2 + $0x18] sm:$0xff]
    %v908 = vld [vmem:[#allocation2 + $0x20] sm:$0xff]
    %v909 = vld [vmem:[#allocation2 + $0x28] sm:$0x1]
    %v910 = vld [vmem:[#allocation2 + $0x30] sm:$0xff]
    %v911 = vld [vmem:[#allocation2 + $0x38] sm:$0xff]
    %v912 = vld [vmem:[#allocation2 + $0x40] sm:$0x1]
    %v913 = vld [vmem:[#allocation2 + $0x48] sm:$0xff]
    %v914 = vld [vmem:[#allocation2 + $0x50] sm:$0xff]
    %v915 = vld [vmem:[#allocation2 + $0x58] sm:$0x1]
    %v916 = vld [vmem:[#allocation2 + $0x60] sm:$0xff]
    %v917 = vld [vmem:[#allocation2 + $0x68] sm:$0xff]
    %v918 = vld [vmem:[#allocation2 + $0x70] sm:$0x1]
    %v919 = vld [vmem:[#allocation2 + $0x78] sm:$0xff]
    %v920 = vld [vmem:[#allocation2 + $0x80] sm:$0xff]
    %v921 = vld [vmem:[#allocation2 + $0x88] sm:$0x1]
    %v922 = vld [vmem:[#allocation2 + $0x90] sm:$0xff]
    %v923 = vld [vmem:[#allocation2 + $0x98] sm:$0xff]
    %v924 = vld [vmem:[#allocation2 + $0xa0] sm:$0x1]
    %v925 = vld [vmem:[#allocation2 + $0xa8] sm:$0xff]
    %v926 = vld [vmem:[#allocation2 + $0xb0] sm:$0xff]
    %v927 = vld [vmem:[#allocation2 + $0xb8] sm:$0x1]
    %v928 = vld [vmem:[#allocation2 + $0xc0] sm:$0xff]
    %v929 = vld [vmem:[#allocation2 + $0xc8] sm:$0xff]
    %v930 = vld [vmem:[#allocation2 + $0xd0] sm:$0x1]
    %v931 = vld [vmem:[#allocation2 + $0xd8] sm:$0xff]
    %v932 = vld [vmem:[#allocation2 + $0xe0] sm:$0xff]
    %v933 = vld [vmem:[#allocation2 + $0xe8] sm:$0x1]
    %v934 = vld [vmem:[#allocation2 + $0xf0] sm:$0xff]
    %v935 = vld [vmem:[#allocation2 + $0xf8] sm:$0xff]
    %v936 = vld [vmem:[#allocation2 + $0x100] sm:$0x1]
    %v937 = vld [vmem:[#allocation2 + $0x108] sm:$0xff]
    %v938 = vld [vmem:[#allocation2 + $0x110] sm:$0xff]
    %v939 = vld [vmem:[#allocation2 + $0x118] sm:$0x1]
    %v940 = vld [vmem:[#allocation2 + $0x120] sm:$0xff]
    %v941 = vld [vmem:[#allocation2 + $0x128] sm:$0xff]
    %v942 = vld [vmem:[#allocation2 + $0x130] sm:$0x1]
    %v943 = vld [vmem:[#allocation2 + $0x138] sm:$0xff]
    %v944 = vld [vmem:[#allocation2 + $0x140] sm:$0xff]
    %v945 = vld [vmem:[#allocation2 + $0x148] sm:$0x1]
    %v946 = vld [vmem:[#allocation2 + $0x150] sm:$0xff]
    %v947 = vld [vmem:[#allocation2 + $0x158] sm:$0xff]
    %v948 = vld [vmem:[#allocation2 + $0x160] sm:$0x1]
    %v949 = vld [vmem:[#allocation2 + $0x168] sm:$0xff]
    %v950 = vld [vmem:[#allocation2 + $0x170] sm:$0xff]
    %v951 = vld [vmem:[#allocation2 + $0x178] sm:$0x1]
    %v952 = vld [vmem:[%s579] sm:$0xff]
    %v953 = vld [vmem:[%s579 + $0x8] sm:$0xff]
    %v954 = vld [vmem:[%s579 + $0x10] sm:$0x1]
    %v955 = vld [vmem:[%s579 + $0x18] sm:$0xff]
    %v956 = vld [vmem:[%s579 + $0x20] sm:$0xff]
    %v957 = vld [vmem:[%s579 + $0x28] sm:$0x1]
    %v958 = vld [vmem:[%s579 + $0x30] sm:$0xff]
    %v959 = vld [vmem:[%s579 + $0x38] sm:$0xff]
    %v960 = vld [vmem:[%s579 + $0x40] sm:$0x1]
    %v961 = vld [vmem:[%s579 + $0x48] sm:$0xff]
    %v962 = vld [vmem:[%s579 + $0x50] sm:$0xff]
    %v963 = vld [vmem:[%s579 + $0x58] sm:$0x1]
    %v964 = vld [vmem:[%s579 + $0x60] sm:$0xff]
    %v965 = vld [vmem:[%s579 + $0x68] sm:$0xff]
    %v966 = vld [vmem:[%s579 + $0x70] sm:$0x1]
    %v967 = vld [vmem:[%s579 + $0x78] sm:$0xff]
    %v968 = vld [vmem:[%s579 + $0x80] sm:$0xff]
    %v969 = vld [vmem:[%s579 + $0x88] sm:$0x1]
    %v970 = vld [vmem:[%s579 + $0x90] sm:$0xff]
    %v971 = vld [vmem:[%s579 + $0x98] sm:$0xff]
    %v972 = vld [vmem:[%s579 + $0xa0] sm:$0x1]
    %v973 = vld [vmem:[%s579 + $0xa8] sm:$0xff]
    %v974 = vld [vmem:[%s579 + $0xb0] sm:$0xff]
    %v975 = vld [vmem:[%s579 + $0xb8] sm:$0x1]
    %v976 = vld [vmem:[%s579 + $0xc0] sm:$0xff]
    %v977 = vld [vmem:[%s579 + $0xc8] sm:$0xff]
    %v978 = vld [vmem:[%s579 + $0xd0] sm:$0x1]
    %v979 = vld [vmem:[%s579 + $0xd8] sm:$0xff]
    %v980 = vld [vmem:[%s579 + $0xe0] sm:$0xff]
    %v981 = vld [vmem:[%s579 + $0xe8] sm:$0x1]
    %v982 = vld [vmem:[%s579 + $0xf0] sm:$0xff]
    %v983 = vld [vmem:[%s579 + $0xf8] sm:$0xff]
    %v984 = vld [vmem:[%s579 + $0x100] sm:$0x1]
    %v985 = vld [vmem:[%s579 + $0x108] sm:$0xff]
    %v986 = vld [vmem:[%s579 + $0x110] sm:$0xff]
    %v987 = vld [vmem:[%s579 + $0x118] sm:$0x1]
    %v988 = vld [vmem:[%s579 + $0x120] sm:$0xff]
    %v989 = vld [vmem:[%s579 + $0x128] sm:$0xff]
    %v990 = vld [vmem:[%s579 + $0x130] sm:$0x1]
    %v991 = vld [vmem:[%s579 + $0x138] sm:$0xff]
    %v992 = vld [vmem:[%s579 + $0x140] sm:$0xff]
    %v993 = vld [vmem:[%s579 + $0x148] sm:$0x1]
    %v994 = vld [vmem:[%s579 + $0x150] sm:$0xff]
    %v995 = vld [vmem:[%s579 + $0x158] sm:$0xff]
    %v996 = vld [vmem:[%s579 + $0x160] sm:$0x1]
    %v997 = vld [vmem:[%s579 + $0x168] sm:$0xff]
    %v998 = vld [vmem:[%s579 + $0x170] sm:$0xff]
    %v999 = vld [vmem:[%s579 + $0x178] sm:$0x1]
    %v1000 = vmax.f32 %v904, %v952
    %v1001 = vmax.f32 %v905, %v953
    %v1002 = vmax.f32 %v906, %v954
    %v1003 = vmax.f32 %v907, %v955
    %v1004 = vmax.f32 %v908, %v956
    %v1005 = vmax.f32 %v909, %v957
    %v1006 = vmax.f32 %v910, %v958
    %v1007 = vmax.f32 %v911, %v959
    %v1008 = vmax.f32 %v912, %v960
    %v1009 = vmax.f32 %v913, %v961
    %v1010 = vmax.f32 %v914, %v962
    %v1011 = vmax.f32 %v915, %v963
    %v1012 = vmax.f32 %v916, %v964
    %v1013 = vmax.f32 %v917, %v965
    %v1014 = vmax.f32 %v918, %v966
    %v1015 = vmax.f32 %v919, %v967
    %v1016 = vmax.f32 %v920, %v968
    %v1017 = vmax.f32 %v921, %v969
    %v1018 = vmax.f32 %v922, %v970
    %v1019 = vmax.f32 %v923, %v971
    %v1020 = vmax.f32 %v924, %v972
    %v1021 = vmax.f32 %v925, %v973
    %v1022 = vmax.f32 %v926, %v974
    %v1023 = vmax.f32 %v927, %v975
    %v1024 = vmax.f32 %v928, %v976
    %v1025 = vmax.f32 %v929, %v977
    %v1026 = vmax.f32 %v930, %v978
    %v1027 = vmax.f32 %v931, %v979
    %v1028 = vmax.f32 %v932, %v980
    %v1029 = vmax.f32 %v933, %v981
    %v1030 = vmax.f32 %v934, %v982
    %v1031 = vmax.f32 %v935, %v983
    %v1032 = vmax.f32 %v936, %v984
    %v1033 = vmax.f32 %v937, %v985
    %v1034 = vmax.f32 %v938, %v986
    %v1035 = vmax.f32 %v939, %v987
    %v1036 = vmax.f32 %v940, %v988
    %v1037 = vmax.f32 %v941, %v989
    %v1038 = vmax.f32 %v942, %v990
    %v1039 = vmax.f32 %v943, %v991
    %v1040 = vmax.f32 %v944, %v992
    %v1041 = vmax.f32 %v945, %v993
    %v1042 = vmax.f32 %v946, %v994
    %v1043 = vmax.f32 %v947, %v995
    %v1044 = vmax.f32 %v948, %v996
    %v1045 = vmax.f32 %v949, %v997
    %v1046 = vmax.f32 %v950, %v998
    %v1047 = vmax.f32 %v951, %v999
    %1048 = vst [vmem:[#allocation2] sm:$0xff] %v1000
    %1049 = vst [vmem:[#allocation2 + $0x8] sm:$0xff] %v1001
    %1050 = vst [vmem:[#allocation2 + $0x10] sm:$0x1] %v1002
    %1051 = vst [vmem:[#allocation2 + $0x18] sm:$0xff] %v1003
    %1052 = vst [vmem:[#allocation2 + $0x20] sm:$0xff] %v1004
    %1053 = vst [vmem:[#allocation2 + $0x28] sm:$0x1] %v1005
    %1054 = vst [vmem:[#allocation2 + $0x30] sm:$0xff] %v1006
    %1055 = vst [vmem:[#allocation2 + $0x38] sm:$0xff] %v1007
    %1056 = vst [vmem:[#allocation2 + $0x40] sm:$0x1] %v1008
    %1057 = vst [vmem:[#allocation2 + $0x48] sm:$0xff] %v1009
    %1058 = vst [vmem:[#allocation2 + $0x50] sm:$0xff] %v1010
    %1059 = vst [vmem:[#allocation2 + $0x58] sm:$0x1] %v1011
    %1060 = vst [vmem:[#allocation2 + $0x60] sm:$0xff] %v1012
    %1061 = vst [vmem:[#allocation2 + $0x68] sm:$0xff] %v1013
    %1062 = vst [vmem:[#allocation2 + $0x70] sm:$0x1] %v1014
    %1063 = vst [vmem:[#allocation2 + $0x78] sm:$0xff] %v1015
    %1064 = vst [vmem:[#allocation2 + $0x80] sm:$0xff] %v1016
    %1065 = vst [vmem:[#allocation2 + $0x88] sm:$0x1] %v1017
    %1066 = vst [vmem:[#allocation2 + $0x90] sm:$0xff] %v1018
    %1067 = vst [vmem:[#allocation2 + $0x98] sm:$0xff] %v1019
    %1068 = vst [vmem:[#allocation2 + $0xa0] sm:$0x1] %v1020
    %1069 = vst [vmem:[#allocation2 + $0xa8] sm:$0xff] %v1021
    %1070 = vst [vmem:[#allocation2 + $0xb0] sm:$0xff] %v1022
    %1071 = vst [vmem:[#allocation2 + $0xb8] sm:$0x1] %v1023
    %1072 = vst [vmem:[#allocation2 + $0xc0] sm:$0xff] %v1024
    %1073 = vst [vmem:[#allocation2 + $0xc8] sm:$0xff] %v1025
    %1074 = vst [vmem:[#allocation2 + $0xd0] sm:$0x1] %v1026
    %1075 = vst [vmem:[#allocation2 + $0xd8] sm:$0xff] %v1027
    %1076 = vst [vmem:[#allocation2 + $0xe0] sm:$0xff] %v1028
    %1077 = vst [vmem:[#allocation2 + $0xe8] sm:$0x1] %v1029
    %1078 = vst [vmem:[#allocation2 + $0xf0] sm:$0xff] %v1030
    %1079 = vst [vmem:[#allocation2 + $0xf8] sm:$0xff] %v1031
    %1080 = vst [vmem:[#allocation2 + $0x100] sm:$0x1] %v1032
    %1081 = vst [vmem:[#allocation2 + $0x108] sm:$0xff] %v1033
    %1082 = vst [vmem:[#allocation2 + $0x110] sm:$0xff] %v1034
    %1083 = vst [vmem:[#allocation2 + $0x118] sm:$0x1] %v1035
    %1084 = vst [vmem:[#allocation2 + $0x120] sm:$0xff] %v1036
    %1085 = vst [vmem:[#allocation2 + $0x128] sm:$0xff] %v1037
    %1086 = vst [vmem:[#allocation2 + $0x130] sm:$0x1] %v1038
    %1087 = vst [vmem:[#allocation2 + $0x138] sm:$0xff] %v1039
    %1088 = vst [vmem:[#allocation2 + $0x140] sm:$0xff] %v1040
    %1089 = vst [vmem:[#allocation2 + $0x148] sm:$0x1] %v1041
    %1090 = vst [vmem:[#allocation2 + $0x150] sm:$0xff] %v1042
    %1091 = vst [vmem:[#allocation2 + $0x158] sm:$0xff] %v1043
    %1092 = vst [vmem:[#allocation2 + $0x160] sm:$0x1] %v1044
    %1093 = vst [vmem:[#allocation2 + $0x168] sm:$0xff] %v1045
    %1094 = vst [vmem:[#allocation2 + $0x170] sm:$0xff] %v1046
    %1095 = vst [vmem:[#allocation2 + $0x178] sm:$0x1] %v1047
    %v1096 = vld [vmem:[#allocation2] sm:$0xff]
    %v1097 = vld [vmem:[#allocation2 + $0x8] sm:$0x1f]
    %v1098 = vld [vmem:[#allocation2 + $0x18] sm:$0xff]
    %v1099 = vld [vmem:[#allocation2 + $0x20] sm:$0x1f]
    %v1100 = vld [vmem:[#allocation2 + $0x30] sm:$0xff]
    %v1101 = vld [vmem:[#allocation2 + $0x38] sm:$0x1f]
    %v1102 = vld [vmem:[#allocation2 + $0x48] sm:$0xff]
    %v1103 = vld [vmem:[#allocation2 + $0x50] sm:$0x1f]
    %v1104 = vld [vmem:[#allocation2 + $0x60] sm:$0xff]
    %v1105 = vld [vmem:[#allocation2 + $0x68] sm:$0x1f]
    %v1106 = vld [vmem:[#allocation2 + $0x78] sm:$0xff]
    %v1107 = vld [vmem:[#allocation2 + $0x80] sm:$0x1f]
    %v1108 = vld [vmem:[#allocation2 + $0x90] sm:$0xff]
    %v1109 = vld [vmem:[#allocation2 + $0x98] sm:$0x1f]
    %v1110 = vld [vmem:[#allocation2 + $0xa8] sm:$0xff]
    %v1111 = vld [vmem:[#allocation2 + $0xb0] sm:$0x1f]
    %v1112 = vld [vmem:[#allocation2 + $0xc0] sm:$0xff]
    %v1113 = vld [vmem:[#allocation2 + $0xc8] sm:$0x1f]
    %v1114 = vld [vmem:[#allocation2 + $0xd8] sm:$0xff]
    %v1115 = vld [vmem:[#allocation2 + $0xe0] sm:$0x1f]
    %v1116 = vld [vmem:[#allocation2 + $0xf0] sm:$0xff]
    %v1117 = vld [vmem:[#allocation2 + $0xf8] sm:$0x1f]
    %v1118 = vld [vmem:[#allocation2 + $0x108] sm:$0xff]
    %v1119 = vld [vmem:[#allocation2 + $0x110] sm:$0x1f]
    %v1120 = vld [vmem:[#allocation2 + $0x120] sm:$0xff]
    %v1121 = vld [vmem:[#allocation2 + $0x128] sm:$0x1f]
    %1122 = vst [vmem:[#allocation6] sm:$0xff] %v1096
    %1123 = vst [vmem:[#allocation6 + $0x8] sm:$0x1f] %v1097
    %1124 = vst [vmem:[#allocation6 + $0x10] sm:$0xff] %v1098
    %1125 = vst [vmem:[#allocation6 + $0x18] sm:$0x1f] %v1099
    %1126 = vst [vmem:[#allocation6 + $0x20] sm:$0xff] %v1100
    %1127 = vst [vmem:[#allocation6 + $0x28] sm:$0x1f] %v1101
    %1128 = vst [vmem:[#allocation6 + $0x30] sm:$0xff] %v1102
    %1129 = vst [vmem:[#allocation6 + $0x38] sm:$0x1f] %v1103
    %1130 = vst [vmem:[#allocation6 + $0x40] sm:$0xff] %v1104
    %1131 = vst [vmem:[#allocation6 + $0x48] sm:$0x1f] %v1105
    %1132 = vst [vmem:[#allocation6 + $0x50] sm:$0xff] %v1106
    %1133 = vst [vmem:[#allocation6 + $0x58] sm:$0x1f] %v1107
    %1134 = vst [vmem:[#allocation6 + $0x60] sm:$0xff] %v1108
    %1135 = vst [vmem:[#allocation6 + $0x68] sm:$0x1f] %v1109
    %1136 = vst [vmem:[#allocation6 + $0x70] sm:$0xff] %v1110
    %1137 = vst [vmem:[#allocation6 + $0x78] sm:$0x1f] %v1111
    %1138 = vst [vmem:[#allocation6 + $0x80] sm:$0xff] %v1112
    %1139 = vst [vmem:[#allocation6 + $0x88] sm:$0x1f] %v1113
    %1140 = vst [vmem:[#allocation6 + $0x90] sm:$0xff] %v1114
    %1141 = vst [vmem:[#allocation6 + $0x98] sm:$0x1f] %v1115
    %1142 = vst [vmem:[#allocation6 + $0xa0] sm:$0xff] %v1116
    %1143 = vst [vmem:[#allocation6 + $0xa8] sm:$0x1f] %v1117
    %1144 = vst [vmem:[#allocation6 + $0xb0] sm:$0xff] %v1118
    %1145 = vst [vmem:[#allocation6 + $0xb8] sm:$0x1f] %v1119
    %1146 = vst [vmem:[#allocation6 + $0xc0] sm:$0xff] %v1120
    %1147 = vst [vmem:[#allocation6 + $0xc8] sm:$0x1f] %v1121
    // Predicated region
    $region10: #{tpu_custom_call.1} parent=1 // pred_check
      _
    $region11: #{tpu_custom_call.1} parent=1 // pred_check_branch
      %1149 = sbr.rel (0) target = $region13
    $region12: #{tpu_custom_call.1} parent=1 // pred_region
      %s1151 = ssub.s32 3328, 3328
      %1152 = vsyncadd [#allocation5], %s1151
      %s1153 = sshll.u32 [#allocation6], 4
      %s1154 = int_to_ptr.vmem [resolvable:$true] %s1153
      %1159 = dma.vmem_to_hbm [thread:$0]  %s1154, 3328, %s1, [#allocation5], 128, 128, 8
    $region13: #{tpu_custom_call.1} parent=1 // pred_fallthru
      _
    // Predicated region
    $region14: #{tpu_custom_call.1} parent=1 // pred_check
      _
    $region15: #{tpu_custom_call.1} parent=1 // pred_check_branch
      %1161 = sbr.rel (0) target = $region17
    $region16: #{tpu_custom_call.1} parent=1 // pred_region
      %1162 = dma.done [#allocation5], 3328
    $region17: #{tpu_custom_call.1} parent=1 // pred_fallthru
      _
    %1163 = vsyncpa [#allocation4], 1
    %1164 = vsyncpa [#allocation5], 1

</llo_original>
